<compile_context>
chip_gen: v7x
topology: tpu7x:2x2x1
jax: 0.10.0
libtpu: 0.0.40
codegen_flags: <defaults>
</compile_context>

<pallas_src>
import functools

import jax
import jax.numpy as jnp
from jax.experimental import pallas as pl
from jax.experimental.pallas import tpu as pltpu

_BIG = 1e30          # finite "infinity" for masking padded points
_AUG = 8             # augmented feature width (needs D + 2 <= _AUG)
_LANES = 128
_MAX_TILE_NR = 2048  # keeps the static per-step ref-group loop <= 16 iterations


def _round_up(x, m):
    return ((x + m - 1) // m) * m


def _tpu_vmem_capacity_bytes():
    try:
        return int(pltpu.get_tpu_info().vmem_capacity_bytes)
    except Exception:
        return 64 * 1024 * 1024   # conservative default (v7x per-core VMEM)


def _simplification_loss_kernel(samp_ref, ref_ref, out_ref,
                                min_acc, sum_acc, sqrt_acc, cnt_acc,
                                *, threshold, n_samp, n_ref, num_groups,
                                compute_f1):
    # samp_ref: (1, Ns_pad, AUG)   resident across the ref-tile axis (lhs)
    # ref_ref:  (1, AUG, TILE_NR)  one lane-dense reference tile per grid step (rhs)
    k = pl.program_id(1)
    last_k = pl.num_programs(1) - 1

    @pl.when(k == 0)
    def _init():
        min_acc[...] = jnp.full(min_acc.shape, _BIG, jnp.float32)
        sum_acc[...] = jnp.zeros_like(sum_acc)
        sqrt_acc[...] = jnp.zeros_like(sqrt_acc)
        if compute_f1:
            cnt_acc[...] = jnp.zeros_like(cnt_acc)

    samp = samp_ref[0]            # (Ns_pad, AUG)
    ref_t = ref_ref[0]            # (AUG, TILE_NR)

    row_min = min_acc[...]        # (Ns_pad, 128) lane-dense running min (samp->ref)
    csum = sum_acc[...]           # (1, 128) lane partial sums (ref->samp)
    csqrt = sqrt_acc[...]
    ccnt = cnt_acc[...] if compute_f1 else None

    # Fused single pass: one tiny (K=8) MXU matmul per 128-lane ref group,
    # pure-VPU fold into the lane-dense row-min accumulator, and a sublane min
    # for the ref->samp direction.  No cross-lane reduces in the steady state.
    for g in range(num_groups):
        ref_g = ref_t[:, g * _LANES:(g + 1) * _LANES]               # (AUG, 128)
        d2g = jax.lax.dot_general(
            samp, ref_g, (((1,), (0,)), ((), ())),
            preferred_element_type=jnp.float32,
            precision=jax.lax.Precision.HIGHEST)                    # (Ns_pad, 128)
        row_min = jnp.minimum(row_min, d2g)
        cmin = jnp.min(d2g, axis=0, keepdims=True)                  # (1, 128)
        valid = cmin < (_BIG * 0.5)        # padded ref lanes carry ~_BIG
        c = jnp.maximum(cmin, 0.0)
        zero = jnp.zeros_like(c)
        csum = csum + jnp.where(valid, c, zero)
        csqrt = csqrt + jnp.where(valid, jnp.sqrt(c), zero)
        if compute_f1:
            # Padded lanes have c ~ _BIG >> threshold, so no extra mask needed.
            ccnt = ccnt + jnp.where(c < threshold, 1.0, 0.0)

    min_acc[...] = row_min
    sum_acc[...] = csum
    sqrt_acc[...] = csqrt
    if compute_f1:
        cnt_acc[...] = ccnt

    @pl.when(k == last_k)
    def _finalize():
        # Single deferred cross-lane reduce of the lane-dense min accumulator.
        nearest = jnp.maximum(jnp.min(row_min, axis=1, keepdims=True), 0.0)
        sub = jax.lax.broadcasted_iota(jnp.int32, nearest.shape, 0)
        valid_s = sub < n_samp
        zs = jnp.zeros_like(nearest)
        inv_ns = 1.0 / n_samp
        inv_nr = 1.0 / n_ref

        m1 = jnp.sum(jnp.where(valid_s, nearest, zs)) * inv_ns
        sm1 = jnp.sum(jnp.where(valid_s, jnp.sqrt(nearest), zs)) * inv_ns
        m2 = jnp.sum(csum) * inv_nr
        sm2 = jnp.sum(csqrt) * inv_nr

        cd_p = (sm1 + sm2) * 0.5
        cd_t = m1 + m2

        if compute_f1:
            p1 = jnp.sum(jnp.where(valid_s & (nearest < threshold),
                                   1.0, 0.0)) * inv_ns
            p2 = jnp.sum(ccnt) * inv_nr
            denom = p1 + p2
            f1 = jnp.where(denom > 0.0,
                           2.0 * p1 * p2 / jnp.maximum(denom, 1e-30),
                           0.0)
        else:
            f1 = jnp.float32(0.0)

        # Pack the three scalars into one lane-dense (8, 128) tile:
        # row 0 = cd_p, row 1 = cd_t, row 2 = f1.
        row = jax.lax.broadcasted_iota(jnp.int32, (8, _LANES), 0)
        out_ref[0] = jnp.where(row == 0, cd_p, jnp.where(row == 1, cd_t, f1))


def simplification_loss(ref_pc, samp_pc, calc_f1=False, threshold=0.01):
    """Pallas equivalent of SimplificationLoss.forward(ref_pc, samp_pc, calc_f1)."""
    B, Nr, D = ref_pc.shape
    Bs, Ns, Ds = samp_pc.shape
    assert B == Bs and D == Ds and D + 2 <= _AUG

    ref_f = ref_pc.astype(jnp.float32)
    samp_f = samp_pc.astype(jnp.float32)

    Ns_pad = _round_up(Ns, _LANES)
    nr128 = _round_up(Nr, _LANES)
    num_k = -(-nr128 // _MAX_TILE_NR)                       # ceil
    tile_nr = _round_up(-(-nr128 // num_k), _LANES)         # balanced tiles
    Nr_pad = tile_nr * num_k
    num_groups = tile_nr // _LANES
    # TODO(synk): for Ns_pad >= ~16K the (Ns_pad, 128) running-min scratch gets
    # large; add Ns chunking (inner loop or extra grid axis with wrapper combine).
    # TODO(synk): for B == 1 on v7x, add a second 'parallel' axis over Ns tiles
    # (partials combined in the wrapper) so both TensorCores are used.

    def _pad_and_norm(pc, n, n_pad):
        b = pc.shape[0]
        pc_p = jnp.pad(pc, ((0, 0), (0, n_pad - n), (0, 0)))
        sq = jnp.sum(pc_p * pc_p, axis=-1, keepdims=True)
        valid = (jnp.arange(n_pad) < n)[None, :, None]
        sq = jnp.where(valid, sq, _BIG)     # padded points -> huge distance
        ones = jnp.ones((b, n_pad, 1), jnp.float32)
        zeros = jnp.zeros((b, n_pad, _AUG - D - 2), jnp.float32)
        return pc_p, sq, ones, zeros

    # samp_i . ref_j = -2 s.r + |s|^2 + |r|^2 = ||s_i - r_j||^2
    sp, ssq, sone, szero = _pad_and_norm(samp_f, Ns, Ns_pad)
    samp_aug = jnp.concatenate([-2.0 * sp, ssq, sone, szero], axis=-1)   # (B, Ns_pad, 8)

    rp, rsq, rone, rzero = _pad_and_norm(ref_f, Nr, Nr_pad)
    ref_aug = jnp.concatenate([rp, rone, rsq, rzero], axis=-1)           # (B, Nr_pad, 8)
    ref_aug_t = jnp.transpose(ref_aug, (0, 2, 1))                        # (B, 8, Nr_pad), lane-dense

    # VMEM budget: derive the limit from the chip's capacity (64 MiB on v7x,
    # 128 MiB on v5e/v6e) with headroom; the working set itself is small
    # because the distance tile is produced per 128-lane group.
    est = (2 * Ns_pad * _LANES * 4        # samp blocks (lane-padded), 2 buffers
           + 2 * _AUG * tile_nr * 4       # dense ref blocks, 2 buffers
           + 2 * 8 * _LANES * 4           # packed scalar output blocks
           + Ns_pad * _LANES * 4          # lane-dense running-min scratch
           + 3 * 8 * _LANES * 4           # small column accumulators
           + 3 * Ns_pad * _LANES * 4)     # per-group distance tiles / spill slack
    cap = _tpu_vmem_capacity_bytes()
    allow = min((cap * 3) // 4, 96 * 1024 * 1024)
    vmem_limit = int(max(16 * 1024 * 1024,
                         min(allow, max(32 * 1024 * 1024, est + (8 << 20)))))

    kernel = functools.partial(
        _simplification_loss_kernel,
        threshold=float(threshold), n_samp=Ns, n_ref=Nr,
        num_groups=num_groups, compute_f1=bool(calc_f1))

    out = pl.pallas_call(
        kernel,
        out_shape=jax.ShapeDtypeStruct((B, 8, _LANES), jnp.float32),
        grid_spec=pltpu.PrefetchScalarGridSpec(
            num_scalar_prefetch=0,
            grid=(B, num_k),
            in_specs=[
                pl.BlockSpec((1, Ns_pad, _AUG), lambda b, k: (b, 0, 0)),
                pl.BlockSpec((1, _AUG, tile_nr), lambda b, k: (b, 0, k)),
            ],
            out_specs=pl.BlockSpec((1, 8, _LANES), lambda b, k: (b, 0, 0)),
            scratch_shapes=[
                pltpu.VMEM((Ns_pad, _LANES), jnp.float32),  # lane-dense running min
                pltpu.VMEM((1, _LANES), jnp.float32),       # sum of ref->samp costs
                pltpu.VMEM((1, _LANES), jnp.float32),       # sum of sqrt costs
                pltpu.VMEM((1, _LANES), jnp.float32),       # count(< threshold)
            ],
        ),
        compiler_params=pltpu.CompilerParams(
            dimension_semantics=("parallel", "arbitrary"),
            vmem_limit_bytes=vmem_limit,
        ),
    )(samp_aug, ref_aug_t)

    cd_p = out[:, 0, 0]
    cd_t = out[:, 1, 0]
    if calc_f1:
        return cd_p, cd_t, out[:, 2, 0]
    return cd_p, cd_t


def _reference(ref_pc, samp_pc, threshold=0.01):
    """Pure-JAX reference mirroring the PyTorch module."""
    d = jnp.sum(
        (samp_pc[:, :, None, :] - ref_pc[:, None, :, :]) ** 2, axis=-1)
    cost_p1_p2 = jnp.min(d, axis=2)      # (B, Ns)
    cost_p2_p1 = jnp.min(d, axis=1)      # (B, Nr)
    cd_p = (jnp.mean(jnp.sqrt(cost_p1_p2), 1)
            + jnp.mean(jnp.sqrt(cost_p2_p1), 1)) / 2.0
    cd_t = jnp.mean(cost_p1_p2, 1) + jnp.mean(cost_p2_p1, 1)
    p1 = jnp.mean((cost_p1_p2 < threshold).astype(jnp.float32), 1)
    p2 = jnp.mean((cost_p2_p1 < threshold).astype(jnp.float32), 1)
    f1 = 2.0 * p1 * p2 / (p1 + p2)
    f1 = jnp.where(jnp.isnan(f1), 0.0, f1)
    return cd_p, cd_t, f1


if __name__ == "__main__":
    key = jax.random.PRNGKey(0)
    k_ref, k_samp = jax.random.split(key)
    B, Nr, Ns, D = 2, 128, 96, 3
    ref_pc = jax.random.uniform(k_ref, (B, Nr, D), dtype=jnp.float32)
    samp_pc = jax.random.uniform(k_samp, (B, Ns, D), dtype=jnp.float32)

    # calc_f1=False path
    cd_p, cd_t = simplification_loss(ref_pc, samp_pc, calc_f1=False)
    jax.block_until_ready((cd_p, cd_t))

    # calc_f1=True path
    cd_p2, cd_t2, f1 = simplification_loss(ref_pc, samp_pc, calc_f1=True)
    jax.block_until_ready((cd_p2, cd_t2, f1))

    r_cd_p, r_cd_t, r_f1 = _reference(ref_pc, samp_pc)
    assert jnp.allclose(cd_p, r_cd_p, rtol=1e-3, atol=1e-4)
    assert jnp.allclose(cd_t, r_cd_t, rtol=1e-3, atol=1e-4)
    assert jnp.allclose(cd_p2, r_cd_p, rtol=1e-3, atol=1e-4)
    assert jnp.allclose(cd_t2, r_cd_t, rtol=1e-3, atol=1e-4)
    # F-score is count-based; allow small slack for distances numerically on
    # the threshold boundary.
    assert jnp.allclose(f1, r_f1, rtol=1e-2, atol=2e-2)

    print("KERNEL_OK")
</pallas_src>

<mosaic_0001>
module attributes {stable_mosaic.version = 11 : i64} {
  func.func @_simplification_loss_kernel(%arg0: i32, %arg1: i32, %arg2: memref<1x128x8xf32, #tpu.memory_space<vmem>>, %arg3: memref<1x8x128xf32, #tpu.memory_space<vmem>>, %arg4: memref<1x8x128xf32, #tpu.memory_space<vmem>>, %arg5: memref<128x128xf32, #tpu.memory_space<vmem>>, %arg6: memref<1x128xf32, #tpu.memory_space<vmem>>, %arg7: memref<1x128xf32, #tpu.memory_space<vmem>>, %arg8: memref<1x128xf32, #tpu.memory_space<vmem>>) attributes {dimension_semantics = [#tpu.dimension_semantics<parallel>, #tpu.dimension_semantics<arbitrary>], iteration_bounds = array<i64: 2, 1>, scalar_prefetch = 0 : i64, scratch_operands = 4 : i64, tpu.core_type = #tpu.core_type<tc>, window_params = [{transform_indices = @transform_0, window_bounds = array<i64: 1, 128, 8>}, {transform_indices = @transform_1, window_bounds = array<i64: 1, 8, 128>}, {transform_indices = @transform_2, window_bounds = array<i64: 1, 8, 128>}]} {
    %c0_i32 = arith.constant 0 : i32
    %0 = arith.cmpi eq, %arg1, %c0_i32 : i32
    %1 = arith.extui %0 : i1 to i32
    %c0_i32_0 = arith.constant 0 : i32
    %2 = arith.cmpi ne, %1, %c0_i32_0 : i32
    scf.if %2 {
      %cst_24 = arith.constant 1.000000e+30 : f32
      %30 = vector.broadcast %cst_24 : f32 to vector<128x128xf32>
      %c0_25 = arith.constant 0 : index
      %c0_26 = arith.constant 0 : index
      %31 = vector.load %arg5[%c0_25, %c0_26] : memref<128x128xf32, #tpu.memory_space<vmem>>, vector<128x128xf32>
      tpu.vector_store %arg5[%c0_25, %c0_26], %30 {strides = array<i32>} : memref<128x128xf32, #tpu.memory_space<vmem>>, vector<128x128xf32>,
      %cst_27 = arith.constant 0.000000e+00 : f32
      %32 = vector.broadcast %cst_27 : f32 to vector<1x128xf32>
      %c0_28 = arith.constant 0 : index
      %c0_29 = arith.constant 0 : index
      %33 = vector.load %arg6[%c0_28, %c0_29] : memref<1x128xf32, #tpu.memory_space<vmem>>, vector<1x128xf32>
      tpu.vector_store %arg6[%c0_28, %c0_29], %32 {strides = array<i32>} : memref<1x128xf32, #tpu.memory_space<vmem>>, vector<1x128xf32>,
      %cst_30 = arith.constant 0.000000e+00 : f32
      %34 = vector.broadcast %cst_30 : f32 to vector<1x128xf32>
      %c0_31 = arith.constant 0 : index
      %c0_32 = arith.constant 0 : index
      %35 = vector.load %arg7[%c0_31, %c0_32] : memref<1x128xf32, #tpu.memory_space<vmem>>, vector<1x128xf32>
      tpu.vector_store %arg7[%c0_31, %c0_32], %34 {strides = array<i32>} : memref<1x128xf32, #tpu.memory_space<vmem>>, vector<1x128xf32>,
    } else {
    }
    %c0 = arith.constant 0 : index
    %c0_1 = arith.constant 0 : index
    %c0_2 = arith.constant 0 : index
    %3 = vector.load %arg2[%c0, %c0_1, %c0_2] : memref<1x128x8xf32, #tpu.memory_space<vmem>>, vector<1x128x8xf32>
    %4 = vector.shape_cast %3 : vector<1x128x8xf32> to vector<128x8xf32>
    %c0_3 = arith.constant 0 : index
    %c0_4 = arith.constant 0 : index
    %c0_5 = arith.constant 0 : index
    %5 = vector.load %arg3[%c0_3, %c0_4, %c0_5] : memref<1x8x128xf32, #tpu.memory_space<vmem>>, vector<1x8x128xf32>
    %6 = vector.shape_cast %5 : vector<1x8x128xf32> to vector<8x128xf32>
    %c0_6 = arith.constant 0 : index
    %c0_7 = arith.constant 0 : index
    %7 = vector.load %arg5[%c0_6, %c0_7] : memref<128x128xf32, #tpu.memory_space<vmem>>, vector<128x128xf32>
    %c0_8 = arith.constant 0 : index
    %c0_9 = arith.constant 0 : index
    %8 = vector.load %arg6[%c0_8, %c0_9] : memref<1x128xf32, #tpu.memory_space<vmem>>, vector<1x128xf32>
    %c0_10 = arith.constant 0 : index
    %c0_11 = arith.constant 0 : index
    %9 = vector.load %arg7[%c0_10, %c0_11] : memref<1x128xf32, #tpu.memory_space<vmem>>, vector<1x128xf32>
    %cst = arith.constant dense<0.000000e+00> : vector<128x128xf32>
    %10 = tpu.matmul %4, %6, %cst {dimension_numbers = #tpu.dot_dimension_numbers<[1], [0], [0], [1], [0, 0, 1, 1], [], []>, precision = #tpu.contract_precision<fp32>} : vector<128x8xf32>, vector<8x128xf32>, vector<128x128xf32> -> vector<128x128xf32>
    %11 = arith.minimumf %7, %10 : vector<128x128xf32>
    %cst_12 = arith.constant dense<0x7F800000> : vector<128xf32>
    %12 = vector.multi_reduction <minimumf>, %10, %cst_12 [0] : vector<128x128xf32> to vector<128xf32>
    %13 = vector.shape_cast %12 : vector<128xf32> to vector<1x128xf32>
    %cst_13 = arith.constant 5.000000e+29 : f32
    %14 = vector.broadcast %cst_13 : f32 to vector<1x128xf32>
    %15 = arith.cmpf olt, %13, %14 : vector<1x128xf32>
    %cst_14 = arith.constant 0.000000e+00 : f32
    %16 = vector.broadcast %cst_14 : f32 to vector<1x128xf32>
    %17 = arith.maximumf %13, %16 : vector<1x128xf32>
    %cst_15 = arith.constant 0.000000e+00 : f32
    %18 = vector.broadcast %cst_15 : f32 to vector<1x128xf32>
    %19 = arith.select %15, %17, %18 : vector<1x128xi1>, vector<1x128xf32>
    %20 = arith.addf %8, %19 : vector<1x128xf32>
    %21 = math.sqrt %17 : vector<1x128xf32>
    %22 = arith.select %15, %21, %18 : vector<1x128xi1>, vector<1x128xf32>
    %23 = arith.addf %9, %22 : vector<1x128xf32>
    %c0_16 = arith.constant 0 : index
    %c0_17 = arith.constant 0 : index
    %24 = vector.load %arg5[%c0_16, %c0_17] : memref<128x128xf32, #tpu.memory_space<vmem>>, vector<128x128xf32>
    tpu.vector_store %arg5[%c0_16, %c0_17], %11 {strides = array<i32>} : memref<128x128xf32, #tpu.memory_space<vmem>>, vector<128x128xf32>,
    %c0_18 = arith.constant 0 : index
    %c0_19 = arith.constant 0 : index
    %25 = vector.load %arg6[%c0_18, %c0_19] : memref<1x128xf32, #tpu.memory_space<vmem>>, vector<1x128xf32>
    tpu.vector_store %arg6[%c0_18, %c0_19], %20 {strides = array<i32>} : memref<1x128xf32, #tpu.memory_space<vmem>>, vector<1x128xf32>,
    %c0_20 = arith.constant 0 : index
    %c0_21 = arith.constant 0 : index
    %26 = vector.load %arg7[%c0_20, %c0_21] : memref<1x128xf32, #tpu.memory_space<vmem>>, vector<1x128xf32>
    tpu.vector_store %arg7[%c0_20, %c0_21], %23 {strides = array<i32>} : memref<1x128xf32, #tpu.memory_space<vmem>>, vector<1x128xf32>,
    %c0_i32_22 = arith.constant 0 : i32
    %27 = arith.cmpi eq, %arg1, %c0_i32_22 : i32
    %28 = arith.extui %27 : i1 to i32
    %c0_i32_23 = arith.constant 0 : i32
    %29 = arith.cmpi ne, %28, %c0_i32_23 : i32
    scf.if %29 {
      %cst_24 = arith.constant dense<0x7F800000> : vector<128xf32>
      %30 = vector.multi_reduction <minimumf>, %11, %cst_24 [1] : vector<128x128xf32> to vector<128xf32>
      %31 = vector.shape_cast %30 : vector<128xf32> to vector<128x1xf32>
      %cst_25 = arith.constant 0.000000e+00 : f32
      %32 = vector.broadcast %cst_25 : f32 to vector<128x1xf32>
      %33 = arith.maximumf %31, %32 : vector<128x1xf32>
      %34 = tpu.iota {dimensions = array<i32: 0>} : vector<128x1xi32>
      %c96_i32 = arith.constant 96 : i32
      %35 = vector.broadcast %c96_i32 : i32 to vector<128x1xi32>
      %36 = arith.cmpi slt, %34, %35 : vector<128x1xi32>
      %cst_26 = arith.constant 0.000000e+00 : f32
      %37 = vector.broadcast %cst_26 : f32 to vector<128x1xf32>
      %38 = arith.select %36, %33, %37 : vector<128x1xi1>, vector<128x1xf32>
      %39 = vector.shape_cast %38 : vector<128x1xf32> to vector<1x128x1xf32>
      %cst_27 = arith.constant dense<0.000000e+00> : vector<1xf32>
      %40 = vector.multi_reduction <add>, %39, %cst_27 [1, 2] : vector<1x128x1xf32> to vector<1xf32>
      %41 = vector.shape_cast %40 : vector<1xf32> to vector<1x1x1xf32>
      %42 = vector.extract %41[0, 0, 0] : f32 from vector<1x1x1xf32>
      %cst_28 = arith.constant 0.010416667 : f32
      %43 = arith.mulf %42, %cst_28 : f32
      %44 = math.sqrt %33 : vector<128x1xf32>
      %45 = arith.select %36, %44, %37 : vector<128x1xi1>, vector<128x1xf32>
      %46 = vector.shape_cast %45 : vector<128x1xf32> to vector<1x128x1xf32>
      %cst_29 = arith.constant dense<0.000000e+00> : vector<1xf32>
      %47 = vector.multi_reduction <add>, %46, %cst_29 [1, 2] : vector<1x128x1xf32> to vector<1xf32>
      %48 = vector.shape_cast %47 : vector<1xf32> to vector<1x1x1xf32>
      %49 = vector.extract %48[0, 0, 0] : f32 from vector<1x1x1xf32>
      %cst_30 = arith.constant 0.010416667 : f32
      %50 = arith.mulf %49, %cst_30 : f32
      %51 = vector.shape_cast %20 : vector<1x128xf32> to vector<1x1x128xf32>
      %cst_31 = arith.constant dense<0.000000e+00> : vector<1xf32>
      %52 = vector.multi_reduction <add>, %51, %cst_31 [1, 2] : vector<1x1x128xf32> to vector<1xf32>
      %53 = vector.shape_cast %52 : vector<1xf32> to vector<1x1x1xf32>
      %54 = vector.extract %53[0, 0, 0] : f32 from vector<1x1x1xf32>
      %cst_32 = arith.constant 7.812500e-03 : f32
      %55 = arith.mulf %54, %cst_32 : f32
      %56 = vector.shape_cast %23 : vector<1x128xf32> to vector<1x1x128xf32>
      %cst_33 = arith.constant dense<0.000000e+00> : vector<1xf32>
      %57 = vector.multi_reduction <add>, %56, %cst_33 [1, 2] : vector<1x1x128xf32> to vector<1xf32>
      %58 = vector.shape_cast %57 : vector<1xf32> to vector<1x1x1xf32>
      %59 = vector.extract %58[0, 0, 0] : f32 from vector<1x1x1xf32>
      %cst_34 = arith.constant 7.812500e-03 : f32
      %60 = arith.mulf %59, %cst_34 : f32
      %61 = arith.addf %50, %60 : f32
      %cst_35 = arith.constant 5.000000e-01 : f32
      %62 = arith.mulf %61, %cst_35 : f32
      %63 = arith.addf %43, %55 : f32
      %64 = tpu.iota {dimensions = array<i32: 0>} : vector<8x128xi32>
      %c0_i32_36 = arith.constant 0 : i32
      %65 = vector.broadcast %c0_i32_36 : i32 to vector<8x128xi32>
      %66 = arith.cmpi eq, %64, %65 : vector<8x128xi32>
      %c1_i32 = arith.constant 1 : i32
      %67 = vector.broadcast %c1_i32 : i32 to vector<8x128xi32>
      %68 = arith.cmpi eq, %64, %67 : vector<8x128xi32>
      %cst_37 = arith.constant 0.000000e+00 : f32
      %69 = vector.broadcast %63 : f32 to vector<8x128xf32>
      %70 = vector.broadcast %cst_37 : f32 to vector<8x128xf32>
      %71 = arith.select %68, %69, %70 : vector<8x128xi1>, vector<8x128xf32>
      %72 = vector.broadcast %62 : f32 to vector<8x128xf32>
      %73 = arith.select %66, %72, %71 : vector<8x128xi1>, vector<8x128xf32>
      %c0_38 = arith.constant 0 : index
      %c0_39 = arith.constant 0 : index
      %c0_40 = arith.constant 0 : index
      %74 = vector.load %arg4[%c0_38, %c0_39, %c0_40] : memref<1x8x128xf32, #tpu.memory_space<vmem>>, vector<1x8x128xf32>
      %75 = vector.shape_cast %74 : vector<1x8x128xf32> to vector<8x128xf32>
      %76 = vector.shape_cast %73 : vector<8x128xf32> to vector<1x8x128xf32>
      tpu.vector_store %arg4[%c0_38, %c0_39, %c0_40], %76 {strides = array<i32>} : memref<1x8x128xf32, #tpu.memory_space<vmem>>, vector<1x8x128xf32>,
    } else {
    }
    return
  }
  func.func @transform_0(%arg0: i32, %arg1: i32) -> (i32, i32, i32) {
    %c0_i32 = arith.constant 0 : i32
    %c0_i32_0 = arith.constant 0 : i32
    %c0_i32_1 = arith.constant 0 : i32
    return %arg0, %c0_i32, %c0_i32_0 : i32, i32, i32
  }
  func.func @transform_1(%arg0: i32, %arg1: i32) -> (i32, i32, i32) {
    %c0_i32 = arith.constant 0 : i32
    %c0_i32_0 = arith.constant 0 : i32
    return %arg0, %c0_i32, %arg1 : i32, i32, i32
  }
  func.func @transform_2(%arg0: i32, %arg1: i32) -> (i32, i32, i32) {
    %c0_i32 = arith.constant 0 : i32
    %c0_i32_0 = arith.constant 0 : i32
    %c0_i32_1 = arith.constant 0 : i32
    return %arg0, %c0_i32, %c0_i32_0 : i32, i32, i32
  }
}

</mosaic_0001>

<llo_original>
// kernel: tpu_custom_call.1
$region0: #{tpu_custom_call.1}
  #allocation0 [shape = 'u32[]', space=smem, size = 0x4, offset = 0x4, fixed_abs, tag = 'smem constant byte address 0x4 - core index']
  #allocation1 [shape = 'u32[144,128]{1,0:T(1,128)}', space=vmem, size = 0x12000, scoped, tag = 'internal scratch']
  #allocation2 [shape = 'f32[128,128]{1,0:T(8,128)}', space=vmem, size = 0x10000, scoped, tag = 'scratch operand']
  #allocation3 [shape = 'f32[1,128]{1,0:T(1,128)}', space=vmem, size = 0x200, scoped, tag = 'scratch operand']
  #allocation4 [shape = 'f32[1,128]{1,0:T(1,128)}', space=vmem, size = 0x200, scoped, tag = 'scratch operand']
  #allocation5 [shape = 'f32[1,128]{1,0:T(1,128)}', space=vmem, size = 0x200, scoped, tag = 'scratch operand']
  %s0 = inlined_call_operand.vmem [shape: f32[2,128,8], index: 0, kind: input, shape index: {}]
  %s1 = inlined_call_operand.vmem [shape: f32[2,8,128], index: 1, kind: input, shape index: {}]
  %s2 = inlined_call_operand.hbm [shape: f32[2,8,128], index: 2, kind: output, shape index: {}]
  %s3 = sld [smem:[#allocation0]]
  $region49: #{tpu_custom_call.1} parent=0
    _
  %s5 = ssub.s32 1, %s3
  %s6 = scalar_select 0, %s5, %s3
  $region1: #{tpu_custom_call.1} parent=0
    #allocation6 [shape = 'u8[8192]{0}', space=vmem, size = 0x2000, scoped, tag = 'output window, operand 0']
    #allocation7 [shape = 's32[2]{0}', space=sflag, size = 0x8, scoped, tag = 'scoped memory for tpu_custom_call.1']
    %7 = vsyncpa [#allocation7], 0
    %s8 = scalar_lea.sflag [#allocation7], 1
    %9 = vsyncpa %s8, 0
    loop: start=0, step=1, limit=4
    $region2: #{tpu_custom_call.1} parent=1 // loop_pre_header
      _
    $region3: #{tpu_custom_call.1} parent=1 // loop_header
      %s11 = sphi 0, %s15
      %p12 = scmp.ge.s32.totalorder %s11, 4
      %s18 = sphi 0, %s30
      %s19 = sphi 0, %s26
      %s20 = sphi 0, %s18
      %s21 = sphi 0, %s19
      %s22 = sphi 0, %s20
      %s23 = sphi 0, %s21
      %s33 = sphi 0, %s35
      %s36 = sphi 0, %s33
      %s37 = sphi 0, %s36
      %s53 = sphi 0, %s37
      %s61 = sphi 0, %s63
      %s64 = sphi 0, %s61
      %s65 = sphi 0, %s64
      %s81 = sphi 0, %s65
      %s87 = sphi 0, %s89
      %s90 = sphi 0, %s87
      %s91 = sphi 0, %s90
      %s107 = sphi 0, %s91
    $region4: #{tpu_custom_call.1} parent=1 // loop_header_branch
      %14 = sbr.rel (%p12) target = $region8
    $region5: #{tpu_custom_call.1} parent=1 // loop_body
      %s16 = ssub.s32 %s11, 1
      %s17 = ssub.s32 %s11, 2
      %s24 = sadd.s32 1, %s19
      %p25 = scmp.ge.s32.totalorder %s24, 1
      %s26 = scalar_select %p25, 0, %s24
      %s27 = sadd.s32 1, %s18
      %s28 = scalar_select %p25, %s27, %s18
      %p29 = scmp.ge.s32.totalorder %s28, 2
      %s30 = scalar_select %p29, 0, %s28
      %s31 = ssub.s32 %s18, %s30
      %p32 = scmp.eq.s32.totalorder %s31, 0
      %s34 = sadd.s32 %s33, 1
      %s35 = scalar_select %p32, %s33, %s34
      %p38 = pneg %p32
      %p39 = scmp.eq.s32.totalorder %s11, 1
      %p40 = por %p38, %p39
      %p41 = scmp.ne.s32.totalorder %s33, %s36
      %p42 = scmp.eq.s32.totalorder %s11, 0
      %p43 = por %p41, %p42
      %p44 = scmp.ne.s32.totalorder %s33, %s36
      %p45 = scmp.eq.s32.totalorder %s16, 1
      %p46 = por %p44, %p45
      %p47 = scmp.ne.s32.totalorder %s36, %s37
      %p48 = scmp.eq.s32.totalorder %s16, 0
      %p49 = por %p47, %p48
      %p50 = scmp.ne.s32.totalorder %s36, %s37
      %p51 = scmp.eq.s32.totalorder %s17, 1
      %p52 = por %p50, %p51
      %p54 = scmp.ne.s32.totalorder %s37, %s53
      %p55 = scmp.eq.s32.totalorder %s17, 0
      %p56 = por %p54, %p55
      %s57 = ssub.s32 %s18, %s30
      %s58 = ssub.s32 %s19, %s26
      %s59 = sor.u32 %s57, %s58
      %p60 = scmp.eq.s32.totalorder %s59, 0
      %s62 = sadd.s32 %s61, 1
      %s63 = scalar_select %p60, %s61, %s62
      %p66 = pneg %p60
      %p67 = scmp.eq.s32.totalorder %s11, 1
      %p68 = por %p66, %p67
      %p69 = scmp.ne.s32.totalorder %s61, %s64
      %p70 = scmp.eq.s32.totalorder %s11, 0
      %p71 = por %p69, %p70
      %p72 = scmp.ne.s32.totalorder %s61, %s64
      %p73 = scmp.eq.s32.totalorder %s16, 1
      %p74 = por %p72, %p73
      %p75 = scmp.ne.s32.totalorder %s64, %s65
      %p76 = scmp.eq.s32.totalorder %s16, 0
      %p77 = por %p75, %p76
      %p78 = scmp.ne.s32.totalorder %s64, %s65
      %p79 = scmp.eq.s32.totalorder %s17, 1
      %p80 = por %p78, %p79
      %p82 = scmp.ne.s32.totalorder %s65, %s81
      %p83 = scmp.eq.s32.totalorder %s17, 0
      %p84 = por %p82, %p83
      %s85 = ssub.s32 %s18, %s30
      %p86 = scmp.eq.s32.totalorder %s85, 0
      %s88 = sadd.s32 %s87, 1
      %s89 = scalar_select %p86, %s87, %s88
      %p92 = pneg %p86
      %p93 = scmp.eq.s32.totalorder %s11, 1
      %p94 = por %p92, %p93
      %p95 = scmp.ne.s32.totalorder %s87, %s90
      %p96 = scmp.eq.s32.totalorder %s11, 0
      %p97 = por %p95, %p96
      %p98 = scmp.ne.s32.totalorder %s87, %s90
      %p99 = scmp.eq.s32.totalorder %s16, 1
      %p100 = por %p98, %p99
      %p101 = scmp.ne.s32.totalorder %s90, %s91
      %p102 = scmp.eq.s32.totalorder %s16, 0
      %p103 = por %p101, %p102
      %p104 = scmp.ne.s32.totalorder %s90, %s91
      %p105 = scmp.eq.s32.totalorder %s17, 1
      %p106 = por %p104, %p105
      %p108 = scmp.ne.s32.totalorder %s91, %s107
      %p109 = scmp.eq.s32.totalorder %s17, 0
      %p110 = por %p108, %p109
      %p111 = scmp.le.s32.totalorder 1, %s11
      %p112 = scmp.lt.s32.totalorder %s11, 3
      %p113 = pnand %p111, %p112
      %p114 = pneg %p113
      // Predicated region
      $region9: #{tpu_custom_call.1} parent=5 // pred_check
        _
      $region10: #{tpu_custom_call.1} parent=5 // pred_check_branch
        %116 = sbr.rel (%p113) target = $region12
      $region11: #{tpu_custom_call.1} parent=5 // pred_region
        %s117 = ssub.s32 %s11, 1
      $region12: #{tpu_custom_call.1} parent=5 // pred_fallthru
        _
      %p118 = scmp.lt.s32.totalorder %s11, 2
      // Predicated region
      $region13: #{tpu_custom_call.1} parent=5 // pred_check
        %p119 = pneg %p118
      $region14: #{tpu_custom_call.1} parent=5 // pred_check_branch
        %121 = sbr.rel (%p119) target = $region16
      $region15: #{tpu_custom_call.1} parent=5 // pred_region
        // Predicated region
        $region17: #{tpu_custom_call.1} parent=15 // pred_check
          %p122 = pneg %p43
        $region18: #{tpu_custom_call.1} parent=15 // pred_check_branch
          %124 = sbr.rel (%p122) target = $region20
        $region19: #{tpu_custom_call.1} parent=15 // pred_region
          %p125 = scmp.lt.s32.totalorder %s18, 1
          %s126 = scalar_select %p125, %s18, 1
          %s127 = smul.addr %s126, 16
          %s128 = smul.addr %s127, 8
          %s129 = scalar_lea.vmem %s0, %s128
        $region20: #{tpu_custom_call.1} parent=15 // pred_fallthru
          _
        // Predicated region
        $region21: #{tpu_custom_call.1} parent=15 // pred_check
          %p130 = pneg %p71
        $region22: #{tpu_custom_call.1} parent=15 // pred_check_branch
          %132 = sbr.rel (%p130) target = $region24
        $region23: #{tpu_custom_call.1} parent=15 // pred_region
          %p133 = scmp.lt.s32.totalorder %s18, 1
          %s134 = scalar_select %p133, %s18, 1
          %p135 = scmp.lt.s32.totalorder %s19, 0
          %s136 = scalar_select %p135, %s19, 0
          %s137 = sadd.s32 %s136, %s134
          %s138 = smul.addr %s137, 8
          %s139 = scalar_lea.vmem %s1, %s138
        $region24: #{tpu_custom_call.1} parent=15 // pred_fallthru
          _
      $region16: #{tpu_custom_call.1} parent=5 // pred_fallthru
        _
      %p140 = scmp.le.s32.totalorder 1, %s11
      %p141 = scmp.lt.s32.totalorder %s11, 3
      %p142 = pnand %p140, %p141
      %p143 = pneg %p142
      // Predicated region
      $region25: #{tpu_custom_call.1} parent=5 // pred_check
        _
      $region26: #{tpu_custom_call.1} parent=5 // pred_check_branch
        %145 = sbr.rel (%p142) target = $region28
      $region27: #{tpu_custom_call.1} parent=5 // pred_region
        %s146 = ssub.s32 %s11, 1
        %p147 = scmp.lt.s32.totalorder %s20, 1
        %s148 = scalar_select %p147, %s20, 1
        %s149 = smul.addr %s148, 16
        %s150 = smul.addr %s149, 8
        %s151 = scalar_lea.vmem %s0, %s150
        %p152 = pneg %p49
        %p153 = pneg %p46
        %p154 = scmp.lt.s32.totalorder %s20, 1
        %s155 = scalar_select %p154, %s20, 1
        %p156 = scmp.lt.s32.totalorder %s21, 0
        %s157 = scalar_select %p156, %s21, 0
        %s158 = sadd.s32 %s157, %s155
        %s159 = smul.addr %s158, 8
        %s160 = scalar_lea.vmem %s1, %s159
        %p161 = pneg %p77
        %p162 = pneg %p74
        %p163 = pneg %p103
        %p164 = pneg %p100
        %s165 = sand.u32 %s90, 1
        %s166 = scalar_lea.sflag [#allocation7], %s165
        %s167 = sand.u32 %s90, 1
        %s168 = smul.addr %s167, 8
        %s169 = scalar_lea.vmem [#allocation6], %s168
        %p170 = scmp.lt.s32.totalorder %s20, 1
        %s171 = scalar_select %p170, %s20, 1
        %s172 = smul.addr %s171, 16
        %s173 = smul.addr %s172, 8
        %s174 = scalar_lea.vmem %s0, %s173
        %p175 = scmp.lt.s32.totalorder %s20, 1
        %s176 = scalar_select %p175, %s20, 1
        %p177 = scmp.lt.s32.totalorder %s21, 0
        %s178 = scalar_select %p177, %s21, 0
        %s179 = sadd.s32 %s178, %s176
        %s180 = smul.addr %s179, 8
        %s181 = scalar_lea.vmem %s1, %s180
        %p182 = scmp.eq.s32.totalorder %s21, 0
        // Predicated region
        $region29: #{tpu_custom_call.1} parent=27 // pred_check
          %p183 = pneg %p182
        $region30: #{tpu_custom_call.1} parent=27 // pred_check_branch
          %185 = sbr.rel (%p183) target = $region32
        $region31: #{tpu_custom_call.1} parent=27 // pred_region
          %186 = vst [vmem:[#allocation2] sm:$0xff] 1e+30
          %187 = vst [vmem:[#allocation2 + $0x8] sm:$0xff] 1e+30
          %188 = vst [vmem:[#allocation2 + $0x10] sm:$0xff] 1e+30
          %189 = vst [vmem:[#allocation2 + $0x18] sm:$0xff] 1e+30
          %190 = vst [vmem:[#allocation2 + $0x20] sm:$0xff] 1e+30
          %191 = vst [vmem:[#allocation2 + $0x28] sm:$0xff] 1e+30
          %192 = vst [vmem:[#allocation2 + $0x30] sm:$0xff] 1e+30
          %193 = vst [vmem:[#allocation2 + $0x38] sm:$0xff] 1e+30
          %194 = vst [vmem:[#allocation2 + $0x40] sm:$0xff] 1e+30
          %195 = vst [vmem:[#allocation2 + $0x48] sm:$0xff] 1e+30
          %196 = vst [vmem:[#allocation2 + $0x50] sm:$0xff] 1e+30
          %197 = vst [vmem:[#allocation2 + $0x58] sm:$0xff] 1e+30
          %198 = vst [vmem:[#allocation2 + $0x60] sm:$0xff] 1e+30
          %199 = vst [vmem:[#allocation2 + $0x68] sm:$0xff] 1e+30
          %200 = vst [vmem:[#allocation2 + $0x70] sm:$0xff] 1e+30
          %201 = vst [vmem:[#allocation2 + $0x78] sm:$0xff] 1e+30
          %202 = vst [vmem:[#allocation3] sm:$0x1] 0.0
          %203 = vst [vmem:[#allocation4] sm:$0x1] 0.0
        $region32: #{tpu_custom_call.1} parent=27 // pred_fallthru
          _
        %v204 = vld [vmem:[%s174] sm:$0xff]
        %v205 = vld [vmem:[%s174 + $0x8] sm:$0xff]
        %v206 = vld [vmem:[%s174 + $0x10] sm:$0xff]
        %v207 = vld [vmem:[%s174 + $0x18] sm:$0xff]
        %v208 = vld [vmem:[%s174 + $0x20] sm:$0xff]
        %v209 = vld [vmem:[%s174 + $0x28] sm:$0xff]
        %v210 = vld [vmem:[%s174 + $0x30] sm:$0xff]
        %v211 = vld [vmem:[%s174 + $0x38] sm:$0xff]
        %v212 = vld [vmem:[%s174 + $0x40] sm:$0xff]
        %v213 = vld [vmem:[%s174 + $0x48] sm:$0xff]
        %v214 = vld [vmem:[%s174 + $0x50] sm:$0xff]
        %v215 = vld [vmem:[%s174 + $0x58] sm:$0xff]
        %v216 = vld [vmem:[%s174 + $0x60] sm:$0xff]
        %v217 = vld [vmem:[%s174 + $0x68] sm:$0xff]
        %v218 = vld [vmem:[%s174 + $0x70] sm:$0xff]
        %v219 = vld [vmem:[%s174 + $0x78] sm:$0xff]
        %v220 = vld [vmem:[%s181] sm:$0xff]
        %v221 = vld [vmem:[#allocation2] sm:$0xff]
        %v222 = vld [vmem:[#allocation2 + $0x8] sm:$0xff]
        %v223 = vld [vmem:[#allocation2 + $0x10] sm:$0xff]
        %v224 = vld [vmem:[#allocation2 + $0x18] sm:$0xff]
        %v225 = vld [vmem:[#allocation2 + $0x20] sm:$0xff]
        %v226 = vld [vmem:[#allocation2 + $0x28] sm:$0xff]
        %v227 = vld [vmem:[#allocation2 + $0x30] sm:$0xff]
        %v228 = vld [vmem:[#allocation2 + $0x38] sm:$0xff]
        %v229 = vld [vmem:[#allocation2 + $0x40] sm:$0xff]
        %v230 = vld [vmem:[#allocation2 + $0x48] sm:$0xff]
        %v231 = vld [vmem:[#allocation2 + $0x50] sm:$0xff]
        %v232 = vld [vmem:[#allocation2 + $0x58] sm:$0xff]
        %v233 = vld [vmem:[#allocation2 + $0x60] sm:$0xff]
        %v234 = vld [vmem:[#allocation2 + $0x68] sm:$0xff]
        %v235 = vld [vmem:[#allocation2 + $0x70] sm:$0xff]
        %v236 = vld [vmem:[#allocation2 + $0x78] sm:$0xff]
        %v237 = vld [vmem:[#allocation3] sm:$0x1]
        %v238 = vld [vmem:[#allocation4] sm:$0x1]
        %vm239 = vcmask 64512
        %v241 = vsel %vm239, %v204, 0
        %v244 = vsel %vm239, %v205, 0
        %v247 = vsel %vm239, %v206, 0
        %v250 = vsel %vm239, %v207, 0
        %v253 = vsel %vm239, %v208, 0
        %v256 = vsel %vm239, %v209, 0
        %v259 = vsel %vm239, %v210, 0
        %v262 = vsel %vm239, %v211, 0
        %v265 = vsel %vm239, %v212, 0
        %v268 = vsel %vm239, %v213, 0
        %v271 = vsel %vm239, %v214, 0
        %v274 = vsel %vm239, %v215, 0
        %v277 = vsel %vm239, %v216, 0
        %v280 = vsel %vm239, %v217, 0
        %v283 = vsel %vm239, %v218, 0
        %v286 = vsel %vm239, %v219, 0
        %288 = vmatprep.subr.mxu0 0.0
        %v289 = vand.u32 %v220, 4294901760
        %290 = vmatpush1.msra.mxu0 %v289
        %291 = vmatprep.subr.mxu0 0.0
        %292 = vmatpush1.msra.mxu0 0.0
        %293 = vmatprep.subr.mxu0 0.0
        %294 = vmatpush1.msra.mxu0 0.0
        %295 = vmatprep.subr.mxu0 0.0
        %296 = vmatpush1.msra.mxu0 0.0
        %297 = vmatprep.subr.mxu0 0.0
        %298 = vmatpush1.msra.mxu0 0.0
        %299 = vmatprep.subr.mxu0 0.0
        %300 = vmatpush1.msra.mxu0 0.0
        %301 = vmatprep.subr.mxu0 0.0
        %302 = vmatpush1.msra.mxu0 0.0
        %303 = vmatprep.subr.mxu0 0.0
        %304 = vmatpush1.msra.mxu0 0.0
        %305 = vmatprep.subr.mxu0 0.0
        %306 = vmatpush1.msra.mxu0 0.0
        %307 = vmatprep.subr.mxu0 0.0
        %308 = vmatpush1.msra.mxu0 0.0
        %309 = vmatprep.subr.mxu0 0.0
        %310 = vmatpush1.msra.mxu0 0.0
        %311 = vmatprep.subr.mxu0 0.0
        %312 = vmatpush1.msra.mxu0 0.0
        %313 = vmatprep.subr.mxu0 0.0
        %314 = vmatpush1.msra.mxu0 0.0
        %315 = vmatprep.subr.mxu0 0.0
        %316 = vmatpush1.msra.mxu0 0.0
        %317 = vmatprep.subr.mxu0 0.0
        %318 = vmatpush1.msra.mxu0 0.0
        %319 = vmatprep.subr.mxu0 0.0
        %320 = vmatpush1.msra.mxu0 0.0
        %321 = vmatprep.subr.mxu0 0.0
        %322 = vmatpush1.msra.mxu0 0.0
        %323 = vmatprep.subr.mxu0 0.0
        %324 = vmatpush1.msra.mxu0 0.0
        %325 = vmatprep.subr.mxu0 0.0
        %326 = vmatpush1.msra.mxu0 0.0
        %327 = vmatprep.subr.mxu0 0.0
        %328 = vmatpush1.msra.mxu0 0.0
        %329 = vmatprep.subr.mxu0 0.0
        %330 = vmatpush1.msra.mxu0 0.0
        %331 = vmatprep.subr.mxu0 0.0
        %332 = vmatpush1.msra.mxu0 0.0
        %333 = vmatprep.subr.mxu0 0.0
        %334 = vmatpush1.msra.mxu0 0.0
        %335 = vmatprep.subr.mxu0 0.0
        %336 = vmatpush1.msra.mxu0 0.0
        %337 = vmatprep.subr.mxu0 0.0
        %338 = vmatpush1.msra.mxu0 0.0
        %339 = vmatprep.subr.mxu0 0.0
        %340 = vmatpush1.msra.mxu0 0.0
        %341 = vmatprep.subr.mxu0 0.0
        %342 = vmatpush1.msra.mxu0 0.0
        %343 = vmatprep.subr.mxu0 0.0
        %344 = vmatpush1.msra.mxu0 0.0
        %345 = vmatprep.subr.mxu0 0.0
        %346 = vmatpush1.msra.mxu0 0.0
        %347 = vmatprep.subr.mxu0 0.0
        %348 = vmatpush1.msra.mxu0 0.0
        %349 = vmatprep.subr.mxu0 0.0
        %350 = vmatpush1.msra.mxu0 0.0
        %351 = vmatprep.subr.mxu0 0.0
        %352 = vmatpush1.msra.mxu0 0.0
        %353 = vmatprep.mubr.f32.mxu0 0.0
        %v354 = vand.u32 %v241, 4294901760
        %v355 = vsub.f32 %v241, %v354
        %v356 = vand.u32 %v355, 4294901760
        %v357 = vsub.f32 %v355, %v356
        %v358 = vand.u32 %v357, 4294901760
        %359 = vmatmul.mubr.f32.gmra.mrb[0].mxu0 %v358
        %v360 = vpop.f32.mrb[0].mxu0
        %v361 = vadd.f32 0.0, %v360
        %v362 = vpop.f32.mrb[0].mxu0
        %363 = vmatprep.mubr.f32.mxu0 0.0
        %v364 = vand.u32 %v244, 4294901760
        %v365 = vsub.f32 %v244, %v364
        %v366 = vand.u32 %v365, 4294901760
        %v367 = vsub.f32 %v365, %v366
        %v368 = vand.u32 %v367, 4294901760
        %369 = vmatmul.mubr.f32.gmra.mrb[0].mxu0 %v368
        %v370 = vpop.f32.mrb[0].mxu0
        %v371 = vadd.f32 0.0, %v370
        %v372 = vpop.f32.mrb[0].mxu0
        %373 = vmatprep.mubr.f32.mxu0 0.0
        %v374 = vand.u32 %v247, 4294901760
        %v375 = vsub.f32 %v247, %v374
        %v376 = vand.u32 %v375, 4294901760
        %v377 = vsub.f32 %v375, %v376
        %v378 = vand.u32 %v377, 4294901760
        %379 = vmatmul.mubr.f32.gmra.mrb[0].mxu0 %v378
        %v380 = vpop.f32.mrb[0].mxu0
        %v381 = vadd.f32 0.0, %v380
        %v382 = vpop.f32.mrb[0].mxu0
        %383 = vmatprep.mubr.f32.mxu0 0.0
        %v384 = vand.u32 %v250, 4294901760
        %v385 = vsub.f32 %v250, %v384
        %v386 = vand.u32 %v385, 4294901760
        %v387 = vsub.f32 %v385, %v386
        %v388 = vand.u32 %v387, 4294901760
        %389 = vmatmul.mubr.f32.gmra.mrb[0].mxu0 %v388
        %v390 = vpop.f32.mrb[0].mxu0
        %v391 = vadd.f32 0.0, %v390
        %v392 = vpop.f32.mrb[0].mxu0
        %393 = vmatprep.mubr.f32.mxu0 0.0
        %v394 = vand.u32 %v253, 4294901760
        %v395 = vsub.f32 %v253, %v394
        %v396 = vand.u32 %v395, 4294901760
        %v397 = vsub.f32 %v395, %v396
        %v398 = vand.u32 %v397, 4294901760
        %399 = vmatmul.mubr.f32.gmra.mrb[0].mxu0 %v398
        %v400 = vpop.f32.mrb[0].mxu0
        %v401 = vadd.f32 0.0, %v400
        %v402 = vpop.f32.mrb[0].mxu0
        %403 = vmatprep.mubr.f32.mxu0 0.0
        %v404 = vand.u32 %v256, 4294901760
        %v405 = vsub.f32 %v256, %v404
        %v406 = vand.u32 %v405, 4294901760
        %v407 = vsub.f32 %v405, %v406
        %v408 = vand.u32 %v407, 4294901760
        %409 = vmatmul.mubr.f32.gmra.mrb[0].mxu0 %v408
        %v410 = vpop.f32.mrb[0].mxu0
        %v411 = vadd.f32 0.0, %v410
        %v412 = vpop.f32.mrb[0].mxu0
        %413 = vmatprep.mubr.f32.mxu0 0.0
        %v414 = vand.u32 %v259, 4294901760
        %v415 = vsub.f32 %v259, %v414
        %v416 = vand.u32 %v415, 4294901760
        %v417 = vsub.f32 %v415, %v416
        %v418 = vand.u32 %v417, 4294901760
        %419 = vmatmul.mubr.f32.gmra.mrb[0].mxu0 %v418
        %v420 = vpop.f32.mrb[0].mxu0
        %v421 = vadd.f32 0.0, %v420
        %v422 = vpop.f32.mrb[0].mxu0
        %423 = vmatprep.mubr.f32.mxu0 0.0
        %v424 = vand.u32 %v262, 4294901760
        %v425 = vsub.f32 %v262, %v424
        %v426 = vand.u32 %v425, 4294901760
        %v427 = vsub.f32 %v425, %v426
        %v428 = vand.u32 %v427, 4294901760
        %429 = vmatmul.mubr.f32.gmra.mrb[0].mxu0 %v428
        %v430 = vpop.f32.mrb[0].mxu0
        %v431 = vadd.f32 0.0, %v430
        %v432 = vpop.f32.mrb[0].mxu0
        %433 = vmatprep.mubr.f32.mxu0 0.0
        %v434 = vand.u32 %v265, 4294901760
        %v435 = vsub.f32 %v265, %v434
        %v436 = vand.u32 %v435, 4294901760
        %v437 = vsub.f32 %v435, %v436
        %v438 = vand.u32 %v437, 4294901760
        %439 = vmatmul.mubr.f32.gmra.mrb[0].mxu0 %v438
        %v440 = vpop.f32.mrb[0].mxu0
        %v441 = vadd.f32 0.0, %v440
        %v442 = vpop.f32.mrb[0].mxu0
        %443 = vmatprep.mubr.f32.mxu0 0.0
        %v444 = vand.u32 %v268, 4294901760
        %v445 = vsub.f32 %v268, %v444
        %v446 = vand.u32 %v445, 4294901760
        %v447 = vsub.f32 %v445, %v446
        %v448 = vand.u32 %v447, 4294901760
        %449 = vmatmul.mubr.f32.gmra.mrb[0].mxu0 %v448
        %v450 = vpop.f32.mrb[0].mxu0
        %v451 = vadd.f32 0.0, %v450
        %v452 = vpop.f32.mrb[0].mxu0
        %453 = vmatprep.mubr.f32.mxu0 0.0
        %v454 = vand.u32 %v271, 4294901760
        %v455 = vsub.f32 %v271, %v454
        %v456 = vand.u32 %v455, 4294901760
        %v457 = vsub.f32 %v455, %v456
        %v458 = vand.u32 %v457, 4294901760
        %459 = vmatmul.mubr.f32.gmra.mrb[0].mxu0 %v458
        %v460 = vpop.f32.mrb[0].mxu0
        %v461 = vadd.f32 0.0, %v460
        %v462 = vpop.f32.mrb[0].mxu0
        %463 = vmatprep.mubr.f32.mxu0 0.0
        %v464 = vand.u32 %v274, 4294901760
        %v465 = vsub.f32 %v274, %v464
        %v466 = vand.u32 %v465, 4294901760
        %v467 = vsub.f32 %v465, %v466
        %v468 = vand.u32 %v467, 4294901760
        %469 = vmatmul.mubr.f32.gmra.mrb[0].mxu0 %v468
        %v470 = vpop.f32.mrb[0].mxu0
        %v471 = vadd.f32 0.0, %v470
        %v472 = vpop.f32.mrb[0].mxu0
        %473 = vmatprep.mubr.f32.mxu0 0.0
        %v474 = vand.u32 %v277, 4294901760
        %v475 = vsub.f32 %v277, %v474
        %v476 = vand.u32 %v475, 4294901760
        %v477 = vsub.f32 %v475, %v476
        %v478 = vand.u32 %v477, 4294901760
        %479 = vmatmul.mubr.f32.gmra.mrb[0].mxu0 %v478
        %v480 = vpop.f32.mrb[0].mxu0
        %v481 = vadd.f32 0.0, %v480
        %v482 = vpop.f32.mrb[0].mxu0
        %483 = vmatprep.mubr.f32.mxu0 0.0
        %v484 = vand.u32 %v280, 4294901760
        %v485 = vsub.f32 %v280, %v484
        %v486 = vand.u32 %v485, 4294901760
        %v487 = vsub.f32 %v485, %v486
        %v488 = vand.u32 %v487, 4294901760
        %489 = vmatmul.mubr.f32.gmra.mrb[0].mxu0 %v488
        %v490 = vpop.f32.mrb[0].mxu0
        %v491 = vadd.f32 0.0, %v490
        %v492 = vpop.f32.mrb[0].mxu0
        %493 = vmatprep.mubr.f32.mxu0 0.0
        %v494 = vand.u32 %v283, 4294901760
        %v495 = vsub.f32 %v283, %v494
        %v496 = vand.u32 %v495, 4294901760
        %v497 = vsub.f32 %v495, %v496
        %v498 = vand.u32 %v497, 4294901760
        %499 = vmatmul.mubr.f32.gmra.mrb[0].mxu0 %v498
        %v500 = vpop.f32.mrb[0].mxu0
        %v501 = vadd.f32 0.0, %v500
        %v502 = vpop.f32.mrb[0].mxu0
        %503 = vmatprep.mubr.f32.mxu0 0.0
        %v504 = vand.u32 %v286, 4294901760
        %v505 = vsub.f32 %v286, %v504
        %v506 = vand.u32 %v505, 4294901760
        %v507 = vsub.f32 %v505, %v506
        %v508 = vand.u32 %v507, 4294901760
        %509 = vmatmul.mubr.f32.gmra.mrb[0].mxu0 %v508
        %v510 = vpop.f32.mrb[0].mxu0
        %v511 = vadd.f32 0.0, %v510
        %v512 = vpop.f32.mrb[0].mxu0
        %513 = vdwg.mxu0
        %514 = vmatprep.subr.mxu0 0.0
        %v515 = vand.u32 %v220, 4294901760
        %v516 = vsub.f32 %v220, %v515
        %v517 = vand.u32 %v516, 4294901760
        %v518 = vsub.f32 %v516, %v517
        %v519 = vand.u32 %v518, 4294901760
        %520 = vmatpush1.msra.mxu0 %v519
        %521 = vmatprep.subr.mxu0 0.0
        %522 = vmatpush1.msra.mxu0 0.0
        %523 = vmatprep.subr.mxu0 0.0
        %524 = vmatpush1.msra.mxu0 0.0
        %525 = vmatprep.subr.mxu0 0.0
        %526 = vmatpush1.msra.mxu0 0.0
        %527 = vmatprep.subr.mxu0 0.0
        %528 = vmatpush1.msra.mxu0 0.0
        %529 = vmatprep.subr.mxu0 0.0
        %530 = vmatpush1.msra.mxu0 0.0
        %531 = vmatprep.subr.mxu0 0.0
        %532 = vmatpush1.msra.mxu0 0.0
        %533 = vmatprep.subr.mxu0 0.0
        %534 = vmatpush1.msra.mxu0 0.0
        %535 = vmatprep.subr.mxu0 0.0
        %536 = vmatpush1.msra.mxu0 0.0
        %537 = vmatprep.subr.mxu0 0.0
        %538 = vmatpush1.msra.mxu0 0.0
        %539 = vmatprep.subr.mxu0 0.0
        %540 = vmatpush1.msra.mxu0 0.0
        %541 = vmatprep.subr.mxu0 0.0
        %542 = vmatpush1.msra.mxu0 0.0
        %543 = vmatprep.subr.mxu0 0.0
        %544 = vmatpush1.msra.mxu0 0.0
        %545 = vmatprep.subr.mxu0 0.0
        %546 = vmatpush1.msra.mxu0 0.0
        %547 = vmatprep.subr.mxu0 0.0
        %548 = vmatpush1.msra.mxu0 0.0
        %549 = vmatprep.subr.mxu0 0.0
        %550 = vmatpush1.msra.mxu0 0.0
        %551 = vmatprep.subr.mxu0 0.0
        %552 = vmatpush1.msra.mxu0 0.0
        %553 = vmatprep.subr.mxu0 0.0
        %554 = vmatpush1.msra.mxu0 0.0
        %555 = vmatprep.subr.mxu0 0.0
        %556 = vmatpush1.msra.mxu0 0.0
        %557 = vmatprep.subr.mxu0 0.0
        %558 = vmatpush1.msra.mxu0 0.0
        %559 = vmatprep.subr.mxu0 0.0
        %560 = vmatpush1.msra.mxu0 0.0
        %561 = vmatprep.subr.mxu0 0.0
        %562 = vmatpush1.msra.mxu0 0.0
        %563 = vmatprep.subr.mxu0 0.0
        %564 = vmatpush1.msra.mxu0 0.0
        %565 = vmatprep.subr.mxu0 0.0
        %566 = vmatpush1.msra.mxu0 0.0
        %567 = vmatprep.subr.mxu0 0.0
        %568 = vmatpush1.msra.mxu0 0.0
        %569 = vmatprep.subr.mxu0 0.0
        %570 = vmatpush1.msra.mxu0 0.0
        %571 = vmatprep.subr.mxu0 0.0
        %572 = vmatpush1.msra.mxu0 0.0
        %573 = vmatprep.subr.mxu0 0.0
        %574 = vmatpush1.msra.mxu0 0.0
        %575 = vmatprep.subr.mxu0 0.0
        %576 = vmatpush1.msra.mxu0 0.0
        %577 = vmatprep.subr.mxu0 0.0
        %578 = vmatpush1.msra.mxu0 0.0
        %579 = vmatprep.subr.mxu0 0.0
        %580 = vmatpush1.msra.mxu0 0.0
        %581 = vmatprep.subr.mxu0 0.0
        %582 = vmatpush1.msra.mxu0 0.0
        %583 = vmatprep.mubr.f32.mxu0 0.0
        %v584 = vand.u32 %v241, 4294901760
        %585 = vmatmul.mubr.f32.gmra.mrb[0].mxu0 %v584
        %v586 = vpop.f32.mrb[0].mxu0
        %v587 = vadd.f32 %v361, %v586
        %v588 = vpop.f32.mrb[0].mxu0
        %589 = vmatprep.mubr.f32.mxu0 0.0
        %v590 = vand.u32 %v244, 4294901760
        %591 = vmatmul.mubr.f32.gmra.mrb[0].mxu0 %v590
        %v592 = vpop.f32.mrb[0].mxu0
        %v593 = vadd.f32 %v371, %v592
        %v594 = vpop.f32.mrb[0].mxu0
        %595 = vmatprep.mubr.f32.mxu0 0.0
        %v596 = vand.u32 %v247, 4294901760
        %597 = vmatmul.mubr.f32.gmra.mrb[0].mxu0 %v596
        %v598 = vpop.f32.mrb[0].mxu0
        %v599 = vadd.f32 %v381, %v598
        %v600 = vpop.f32.mrb[0].mxu0
        %601 = vmatprep.mubr.f32.mxu0 0.0
        %v602 = vand.u32 %v250, 4294901760
        %603 = vmatmul.mubr.f32.gmra.mrb[0].mxu0 %v602
        %v604 = vpop.f32.mrb[0].mxu0
        %v605 = vadd.f32 %v391, %v604
        %v606 = vpop.f32.mrb[0].mxu0
        %607 = vmatprep.mubr.f32.mxu0 0.0
        %v608 = vand.u32 %v253, 4294901760
        %609 = vmatmul.mubr.f32.gmra.mrb[0].mxu0 %v608
        %v610 = vpop.f32.mrb[0].mxu0
        %v611 = vadd.f32 %v401, %v610
        %v612 = vpop.f32.mrb[0].mxu0
        %613 = vmatprep.mubr.f32.mxu0 0.0
        %v614 = vand.u32 %v256, 4294901760
        %615 = vmatmul.mubr.f32.gmra.mrb[0].mxu0 %v614
        %v616 = vpop.f32.mrb[0].mxu0
        %v617 = vadd.f32 %v411, %v616
        %v618 = vpop.f32.mrb[0].mxu0
        %619 = vmatprep.mubr.f32.mxu0 0.0
        %v620 = vand.u32 %v259, 4294901760
        %621 = vmatmul.mubr.f32.gmra.mrb[0].mxu0 %v620
        %v622 = vpop.f32.mrb[0].mxu0
        %v623 = vadd.f32 %v421, %v622
        %v624 = vpop.f32.mrb[0].mxu0
        %625 = vmatprep.mubr.f32.mxu0 0.0
        %v626 = vand.u32 %v262, 4294901760
        %627 = vmatmul.mubr.f32.gmra.mrb[0].mxu0 %v626
        %v628 = vpop.f32.mrb[0].mxu0
        %v629 = vadd.f32 %v431, %v628
        %v630 = vpop.f32.mrb[0].mxu0
        %631 = vmatprep.mubr.f32.mxu0 0.0
        %v632 = vand.u32 %v265, 4294901760
        %633 = vmatmul.mubr.f32.gmra.mrb[0].mxu0 %v632
        %v634 = vpop.f32.mrb[0].mxu0
        %v635 = vadd.f32 %v441, %v634
        %v636 = vpop.f32.mrb[0].mxu0
        %637 = vmatprep.mubr.f32.mxu0 0.0
        %v638 = vand.u32 %v268, 4294901760
        %639 = vmatmul.mubr.f32.gmra.mrb[0].mxu0 %v638
        %v640 = vpop.f32.mrb[0].mxu0
        %v641 = vadd.f32 %v451, %v640
        %v642 = vpop.f32.mrb[0].mxu0
        %643 = vmatprep.mubr.f32.mxu0 0.0
        %v644 = vand.u32 %v271, 4294901760
        %645 = vmatmul.mubr.f32.gmra.mrb[0].mxu0 %v644
        %v646 = vpop.f32.mrb[0].mxu0
        %v647 = vadd.f32 %v461, %v646
        %v648 = vpop.f32.mrb[0].mxu0
        %649 = vmatprep.mubr.f32.mxu0 0.0
        %v650 = vand.u32 %v274, 4294901760
        %651 = vmatmul.mubr.f32.gmra.mrb[0].mxu0 %v650
        %v652 = vpop.f32.mrb[0].mxu0
        %v653 = vadd.f32 %v471, %v652
        %v654 = vpop.f32.mrb[0].mxu0
        %655 = vmatprep.mubr.f32.mxu0 0.0
        %v656 = vand.u32 %v277, 4294901760
        %657 = vmatmul.mubr.f32.gmra.mrb[0].mxu0 %v656
        %v658 = vpop.f32.mrb[0].mxu0
        %v659 = vadd.f32 %v481, %v658
        %v660 = vpop.f32.mrb[0].mxu0
        %661 = vmatprep.mubr.f32.mxu0 0.0
        %v662 = vand.u32 %v280, 4294901760
        %663 = vmatmul.mubr.f32.gmra.mrb[0].mxu0 %v662
        %v664 = vpop.f32.mrb[0].mxu0
        %v665 = vadd.f32 %v491, %v664
        %v666 = vpop.f32.mrb[0].mxu0
        %667 = vmatprep.mubr.f32.mxu0 0.0
        %v668 = vand.u32 %v283, 4294901760
        %669 = vmatmul.mubr.f32.gmra.mrb[0].mxu0 %v668
        %v670 = vpop.f32.mrb[0].mxu0
        %v671 = vadd.f32 %v501, %v670
        %v672 = vpop.f32.mrb[0].mxu0
        %673 = vmatprep.mubr.f32.mxu0 0.0
        %v674 = vand.u32 %v286, 4294901760
        %675 = vmatmul.mubr.f32.gmra.mrb[0].mxu0 %v674
        %v676 = vpop.f32.mrb[0].mxu0
        %v677 = vadd.f32 %v511, %v676
        %v678 = vpop.f32.mrb[0].mxu0
        %679 = vdwg.mxu0
        %680 = vmatprep.subr.mxu0 0.0
        %v681 = vand.u32 %v220, 4294901760
        %v682 = vsub.f32 %v220, %v681
        %683 = vmatpush1.msra.mxu0 %v682
        %684 = vmatprep.subr.mxu0 0.0
        %685 = vmatpush1.msra.mxu0 0.0
        %686 = vmatprep.subr.mxu0 0.0
        %687 = vmatpush1.msra.mxu0 0.0
        %688 = vmatprep.subr.mxu0 0.0
        %689 = vmatpush1.msra.mxu0 0.0
        %690 = vmatprep.subr.mxu0 0.0
        %691 = vmatpush1.msra.mxu0 0.0
        %692 = vmatprep.subr.mxu0 0.0
        %693 = vmatpush1.msra.mxu0 0.0
        %694 = vmatprep.subr.mxu0 0.0
        %695 = vmatpush1.msra.mxu0 0.0
        %696 = vmatprep.subr.mxu0 0.0
        %697 = vmatpush1.msra.mxu0 0.0
        %698 = vmatprep.subr.mxu0 0.0
        %699 = vmatpush1.msra.mxu0 0.0
        %700 = vmatprep.subr.mxu0 0.0
        %701 = vmatpush1.msra.mxu0 0.0
        %702 = vmatprep.subr.mxu0 0.0
        %703 = vmatpush1.msra.mxu0 0.0
        %704 = vmatprep.subr.mxu0 0.0
        %705 = vmatpush1.msra.mxu0 0.0
        %706 = vmatprep.subr.mxu0 0.0
        %707 = vmatpush1.msra.mxu0 0.0
        %708 = vmatprep.subr.mxu0 0.0
        %709 = vmatpush1.msra.mxu0 0.0
        %710 = vmatprep.subr.mxu0 0.0
        %711 = vmatpush1.msra.mxu0 0.0
        %712 = vmatprep.subr.mxu0 0.0
        %713 = vmatpush1.msra.mxu0 0.0
        %714 = vmatprep.subr.mxu0 0.0
        %715 = vmatpush1.msra.mxu0 0.0
        %716 = vmatprep.subr.mxu0 0.0
        %717 = vmatpush1.msra.mxu0 0.0
        %718 = vmatprep.subr.mxu0 0.0
        %719 = vmatpush1.msra.mxu0 0.0
        %720 = vmatprep.subr.mxu0 0.0
        %721 = vmatpush1.msra.mxu0 0.0
        %722 = vmatprep.subr.mxu0 0.0
        %723 = vmatpush1.msra.mxu0 0.0
        %724 = vmatprep.subr.mxu0 0.0
        %725 = vmatpush1.msra.mxu0 0.0
        %726 = vmatprep.subr.mxu0 0.0
        %727 = vmatpush1.msra.mxu0 0.0
        %728 = vmatprep.subr.mxu0 0.0
        %729 = vmatpush1.msra.mxu0 0.0
        %730 = vmatprep.subr.mxu0 0.0
        %731 = vmatpush1.msra.mxu0 0.0
        %732 = vmatprep.subr.mxu0 0.0
        %733 = vmatpush1.msra.mxu0 0.0
        %734 = vmatprep.subr.mxu0 0.0
        %735 = vmatpush1.msra.mxu0 0.0
        %736 = vmatprep.subr.mxu0 0.0
        %737 = vmatpush1.msra.mxu0 0.0
        %738 = vmatprep.subr.mxu0 0.0
        %739 = vmatpush1.msra.mxu0 0.0
        %740 = vmatprep.subr.mxu0 0.0
        %741 = vmatpush1.msra.mxu0 0.0
        %742 = vmatprep.subr.mxu0 0.0
        %743 = vmatpush1.msra.mxu0 0.0
        %744 = vmatprep.subr.mxu0 0.0
        %745 = vmatpush1.msra.mxu0 0.0
        %746 = vmatprep.mubr.f32.mxu0 0.0
        %v747 = vand.u32 %v241, 4294901760
        %v748 = vsub.f32 %v241, %v747
        %749 = vmatmul.mubr.f32.gmra.mrb[0].mxu0 %v748
        %v750 = vpop.f32.mrb[0].mxu0
        %v751 = vadd.f32 %v587, %v750
        %v752 = vpop.f32.mrb[0].mxu0
        %753 = vmatprep.mubr.f32.mxu0 0.0
        %v754 = vand.u32 %v244, 4294901760
        %v755 = vsub.f32 %v244, %v754
        %756 = vmatmul.mubr.f32.gmra.mrb[0].mxu0 %v755
        %v757 = vpop.f32.mrb[0].mxu0
        %v758 = vadd.f32 %v593, %v757
        %v759 = vpop.f32.mrb[0].mxu0
        %760 = vmatprep.mubr.f32.mxu0 0.0
        %v761 = vand.u32 %v247, 4294901760
        %v762 = vsub.f32 %v247, %v761
        %763 = vmatmul.mubr.f32.gmra.mrb[0].mxu0 %v762
        %v764 = vpop.f32.mrb[0].mxu0
        %v765 = vadd.f32 %v599, %v764
        %v766 = vpop.f32.mrb[0].mxu0
        %767 = vmatprep.mubr.f32.mxu0 0.0
        %v768 = vand.u32 %v250, 4294901760
        %v769 = vsub.f32 %v250, %v768
        %770 = vmatmul.mubr.f32.gmra.mrb[0].mxu0 %v769
        %v771 = vpop.f32.mrb[0].mxu0
        %v772 = vadd.f32 %v605, %v771
        %v773 = vpop.f32.mrb[0].mxu0
        %774 = vmatprep.mubr.f32.mxu0 0.0
        %v775 = vand.u32 %v253, 4294901760
        %v776 = vsub.f32 %v253, %v775
        %777 = vmatmul.mubr.f32.gmra.mrb[0].mxu0 %v776
        %v778 = vpop.f32.mrb[0].mxu0
        %v779 = vadd.f32 %v611, %v778
        %v780 = vpop.f32.mrb[0].mxu0
        %781 = vmatprep.mubr.f32.mxu0 0.0
        %v782 = vand.u32 %v256, 4294901760
        %v783 = vsub.f32 %v256, %v782
        %784 = vmatmul.mubr.f32.gmra.mrb[0].mxu0 %v783
        %v785 = vpop.f32.mrb[0].mxu0
        %v786 = vadd.f32 %v617, %v785
        %v787 = vpop.f32.mrb[0].mxu0
        %788 = vmatprep.mubr.f32.mxu0 0.0
        %v789 = vand.u32 %v259, 4294901760
        %v790 = vsub.f32 %v259, %v789
        %791 = vmatmul.mubr.f32.gmra.mrb[0].mxu0 %v790
        %v792 = vpop.f32.mrb[0].mxu0
        %v793 = vadd.f32 %v623, %v792
        %v794 = vpop.f32.mrb[0].mxu0
        %795 = vmatprep.mubr.f32.mxu0 0.0
        %v796 = vand.u32 %v262, 4294901760
        %v797 = vsub.f32 %v262, %v796
        %798 = vmatmul.mubr.f32.gmra.mrb[0].mxu0 %v797
        %v799 = vpop.f32.mrb[0].mxu0
        %v800 = vadd.f32 %v629, %v799
        %v801 = vpop.f32.mrb[0].mxu0
        %802 = vmatprep.mubr.f32.mxu0 0.0
        %v803 = vand.u32 %v265, 4294901760
        %v804 = vsub.f32 %v265, %v803
        %805 = vmatmul.mubr.f32.gmra.mrb[0].mxu0 %v804
        %v806 = vpop.f32.mrb[0].mxu0
        %v807 = vadd.f32 %v635, %v806
        %v808 = vpop.f32.mrb[0].mxu0
        %809 = vmatprep.mubr.f32.mxu0 0.0
        %v810 = vand.u32 %v268, 4294901760
        %v811 = vsub.f32 %v268, %v810
        %812 = vmatmul.mubr.f32.gmra.mrb[0].mxu0 %v811
        %v813 = vpop.f32.mrb[0].mxu0
        %v814 = vadd.f32 %v641, %v813
        %v815 = vpop.f32.mrb[0].mxu0
        %816 = vmatprep.mubr.f32.mxu0 0.0
        %v817 = vand.u32 %v271, 4294901760
        %v818 = vsub.f32 %v271, %v817
        %819 = vmatmul.mubr.f32.gmra.mrb[0].mxu0 %v818
        %v820 = vpop.f32.mrb[0].mxu0
        %v821 = vadd.f32 %v647, %v820
        %v822 = vpop.f32.mrb[0].mxu0
        %823 = vmatprep.mubr.f32.mxu0 0.0
        %v824 = vand.u32 %v274, 4294901760
        %v825 = vsub.f32 %v274, %v824
        %826 = vmatmul.mubr.f32.gmra.mrb[0].mxu0 %v825
        %v827 = vpop.f32.mrb[0].mxu0
        %v828 = vadd.f32 %v653, %v827
        %v829 = vpop.f32.mrb[0].mxu0
        %830 = vmatprep.mubr.f32.mxu0 0.0
        %v831 = vand.u32 %v277, 4294901760
        %v832 = vsub.f32 %v277, %v831
        %833 = vmatmul.mubr.f32.gmra.mrb[0].mxu0 %v832
        %v834 = vpop.f32.mrb[0].mxu0
        %v835 = vadd.f32 %v659, %v834
        %v836 = vpop.f32.mrb[0].mxu0
        %837 = vmatprep.mubr.f32.mxu0 0.0
        %v838 = vand.u32 %v280, 4294901760
        %v839 = vsub.f32 %v280, %v838
        %840 = vmatmul.mubr.f32.gmra.mrb[0].mxu0 %v839
        %v841 = vpop.f32.mrb[0].mxu0
        %v842 = vadd.f32 %v665, %v841
        %v843 = vpop.f32.mrb[0].mxu0
        %844 = vmatprep.mubr.f32.mxu0 0.0
        %v845 = vand.u32 %v283, 4294901760
        %v846 = vsub.f32 %v283, %v845
        %847 = vmatmul.mubr.f32.gmra.mrb[0].mxu0 %v846
        %v848 = vpop.f32.mrb[0].mxu0
        %v849 = vadd.f32 %v671, %v848
        %v850 = vpop.f32.mrb[0].mxu0
        %851 = vmatprep.mubr.f32.mxu0 0.0
        %v852 = vand.u32 %v286, 4294901760
        %v853 = vsub.f32 %v286, %v852
        %854 = vmatmul.mubr.f32.gmra.mrb[0].mxu0 %v853
        %v855 = vpop.f32.mrb[0].mxu0
        %v856 = vadd.f32 %v677, %v855
        %v857 = vpop.f32.mrb[0].mxu0
        %858 = vdwg.mxu0
        %859 = vmatprep.subr.mxu0 0.0
        %v860 = vand.u32 %v220, 4294901760
        %861 = vmatpush1.msra.mxu0 %v860
        %862 = vmatprep.subr.mxu0 0.0
        %863 = vmatpush1.msra.mxu0 0.0
        %864 = vmatprep.subr.mxu0 0.0
        %865 = vmatpush1.msra.mxu0 0.0
        %866 = vmatprep.subr.mxu0 0.0
        %867 = vmatpush1.msra.mxu0 0.0
        %868 = vmatprep.subr.mxu0 0.0
        %869 = vmatpush1.msra.mxu0 0.0
        %870 = vmatprep.subr.mxu0 0.0
        %871 = vmatpush1.msra.mxu0 0.0
        %872 = vmatprep.subr.mxu0 0.0
        %873 = vmatpush1.msra.mxu0 0.0
        %874 = vmatprep.subr.mxu0 0.0
        %875 = vmatpush1.msra.mxu0 0.0
        %876 = vmatprep.subr.mxu0 0.0
        %877 = vmatpush1.msra.mxu0 0.0
        %878 = vmatprep.subr.mxu0 0.0
        %879 = vmatpush1.msra.mxu0 0.0
        %880 = vmatprep.subr.mxu0 0.0
        %881 = vmatpush1.msra.mxu0 0.0
        %882 = vmatprep.subr.mxu0 0.0
        %883 = vmatpush1.msra.mxu0 0.0
        %884 = vmatprep.subr.mxu0 0.0
        %885 = vmatpush1.msra.mxu0 0.0
        %886 = vmatprep.subr.mxu0 0.0
        %887 = vmatpush1.msra.mxu0 0.0
        %888 = vmatprep.subr.mxu0 0.0
        %889 = vmatpush1.msra.mxu0 0.0
        %890 = vmatprep.subr.mxu0 0.0
        %891 = vmatpush1.msra.mxu0 0.0
        %892 = vmatprep.subr.mxu0 0.0
        %893 = vmatpush1.msra.mxu0 0.0
        %894 = vmatprep.subr.mxu0 0.0
        %895 = vmatpush1.msra.mxu0 0.0
        %896 = vmatprep.subr.mxu0 0.0
        %897 = vmatpush1.msra.mxu0 0.0
        %898 = vmatprep.subr.mxu0 0.0
        %899 = vmatpush1.msra.mxu0 0.0
        %900 = vmatprep.subr.mxu0 0.0
        %901 = vmatpush1.msra.mxu0 0.0
        %902 = vmatprep.subr.mxu0 0.0
        %903 = vmatpush1.msra.mxu0 0.0
        %904 = vmatprep.subr.mxu0 0.0
        %905 = vmatpush1.msra.mxu0 0.0
        %906 = vmatprep.subr.mxu0 0.0
        %907 = vmatpush1.msra.mxu0 0.0
        %908 = vmatprep.subr.mxu0 0.0
        %909 = vmatpush1.msra.mxu0 0.0
        %910 = vmatprep.subr.mxu0 0.0
        %911 = vmatpush1.msra.mxu0 0.0
        %912 = vmatprep.subr.mxu0 0.0
        %913 = vmatpush1.msra.mxu0 0.0
        %914 = vmatprep.subr.mxu0 0.0
        %915 = vmatpush1.msra.mxu0 0.0
        %916 = vmatprep.subr.mxu0 0.0
        %917 = vmatpush1.msra.mxu0 0.0
        %918 = vmatprep.subr.mxu0 0.0
        %919 = vmatpush1.msra.mxu0 0.0
        %920 = vmatprep.subr.mxu0 0.0
        %921 = vmatpush1.msra.mxu0 0.0
        %922 = vmatprep.subr.mxu0 0.0
        %923 = vmatpush1.msra.mxu0 0.0
        %924 = vmatprep.mubr.f32.mxu0 0.0
        %v925 = vand.u32 %v241, 4294901760
        %v926 = vsub.f32 %v241, %v925
        %v927 = vand.u32 %v926, 4294901760
        %928 = vmatmul.mubr.f32.gmra.mrb[0].mxu0 %v927
        %v929 = vpop.f32.mrb[0].mxu0
        %v930 = vadd.f32 %v751, %v929
        %v931 = vpop.f32.mrb[0].mxu0
        %932 = vmatprep.mubr.f32.mxu0 0.0
        %v933 = vand.u32 %v244, 4294901760
        %v934 = vsub.f32 %v244, %v933
        %v935 = vand.u32 %v934, 4294901760
        %936 = vmatmul.mubr.f32.gmra.mrb[0].mxu0 %v935
        %v937 = vpop.f32.mrb[0].mxu0
        %v938 = vadd.f32 %v758, %v937
        %v939 = vpop.f32.mrb[0].mxu0
        %940 = vmatprep.mubr.f32.mxu0 0.0
        %v941 = vand.u32 %v247, 4294901760
        %v942 = vsub.f32 %v247, %v941
        %v943 = vand.u32 %v942, 4294901760
        %944 = vmatmul.mubr.f32.gmra.mrb[0].mxu0 %v943
        %v945 = vpop.f32.mrb[0].mxu0
        %v946 = vadd.f32 %v765, %v945
        %v947 = vpop.f32.mrb[0].mxu0
        %948 = vmatprep.mubr.f32.mxu0 0.0
        %v949 = vand.u32 %v250, 4294901760
        %v950 = vsub.f32 %v250, %v949
        %v951 = vand.u32 %v950, 4294901760
        %952 = vmatmul.mubr.f32.gmra.mrb[0].mxu0 %v951
        %v953 = vpop.f32.mrb[0].mxu0
        %v954 = vadd.f32 %v772, %v953
        %v955 = vpop.f32.mrb[0].mxu0
        %956 = vmatprep.mubr.f32.mxu0 0.0
        %v957 = vand.u32 %v253, 4294901760
        %v958 = vsub.f32 %v253, %v957
        %v959 = vand.u32 %v958, 4294901760
        %960 = vmatmul.mubr.f32.gmra.mrb[0].mxu0 %v959
        %v961 = vpop.f32.mrb[0].mxu0
        %v962 = vadd.f32 %v779, %v961
        %v963 = vpop.f32.mrb[0].mxu0
        %964 = vmatprep.mubr.f32.mxu0 0.0
        %v965 = vand.u32 %v256, 4294901760
        %v966 = vsub.f32 %v256, %v965
        %v967 = vand.u32 %v966, 4294901760
        %968 = vmatmul.mubr.f32.gmra.mrb[0].mxu0 %v967
        %v969 = vpop.f32.mrb[0].mxu0
        %v970 = vadd.f32 %v786, %v969
        %v971 = vpop.f32.mrb[0].mxu0
        %972 = vmatprep.mubr.f32.mxu0 0.0
        %v973 = vand.u32 %v259, 4294901760
        %v974 = vsub.f32 %v259, %v973
        %v975 = vand.u32 %v974, 4294901760
        %976 = vmatmul.mubr.f32.gmra.mrb[0].mxu0 %v975
        %v977 = vpop.f32.mrb[0].mxu0
        %v978 = vadd.f32 %v793, %v977
        %v979 = vpop.f32.mrb[0].mxu0
        %980 = vmatprep.mubr.f32.mxu0 0.0
        %v981 = vand.u32 %v262, 4294901760
        %v982 = vsub.f32 %v262, %v981
        %v983 = vand.u32 %v982, 4294901760
        %984 = vmatmul.mubr.f32.gmra.mrb[0].mxu0 %v983
        %v985 = vpop.f32.mrb[0].mxu0
        %v986 = vadd.f32 %v800, %v985
        %v987 = vpop.f32.mrb[0].mxu0
        %988 = vmatprep.mubr.f32.mxu0 0.0
        %v989 = vand.u32 %v265, 4294901760
        %v990 = vsub.f32 %v265, %v989
        %v991 = vand.u32 %v990, 4294901760
        %992 = vmatmul.mubr.f32.gmra.mrb[0].mxu0 %v991
        %v993 = vpop.f32.mrb[0].mxu0
        %v994 = vadd.f32 %v807, %v993
        %v995 = vpop.f32.mrb[0].mxu0
        %996 = vmatprep.mubr.f32.mxu0 0.0
        %v997 = vand.u32 %v268, 4294901760
        %v998 = vsub.f32 %v268, %v997
        %v999 = vand.u32 %v998, 4294901760
        %1000 = vmatmul.mubr.f32.gmra.mrb[0].mxu0 %v999
        %v1001 = vpop.f32.mrb[0].mxu0
        %v1002 = vadd.f32 %v814, %v1001
        %v1003 = vpop.f32.mrb[0].mxu0
        %1004 = vmatprep.mubr.f32.mxu0 0.0
        %v1005 = vand.u32 %v271, 4294901760
        %v1006 = vsub.f32 %v271, %v1005
        %v1007 = vand.u32 %v1006, 4294901760
        %1008 = vmatmul.mubr.f32.gmra.mrb[0].mxu0 %v1007
        %v1009 = vpop.f32.mrb[0].mxu0
        %v1010 = vadd.f32 %v821, %v1009
        %v1011 = vpop.f32.mrb[0].mxu0
        %1012 = vmatprep.mubr.f32.mxu0 0.0
        %v1013 = vand.u32 %v274, 4294901760
        %v1014 = vsub.f32 %v274, %v1013
        %v1015 = vand.u32 %v1014, 4294901760
        %1016 = vmatmul.mubr.f32.gmra.mrb[0].mxu0 %v1015
        %v1017 = vpop.f32.mrb[0].mxu0
        %v1018 = vadd.f32 %v828, %v1017
        %v1019 = vpop.f32.mrb[0].mxu0
        %1020 = vmatprep.mubr.f32.mxu0 0.0
        %v1021 = vand.u32 %v277, 4294901760
        %v1022 = vsub.f32 %v277, %v1021
        %v1023 = vand.u32 %v1022, 4294901760
        %1024 = vmatmul.mubr.f32.gmra.mrb[0].mxu0 %v1023
        %v1025 = vpop.f32.mrb[0].mxu0
        %v1026 = vadd.f32 %v835, %v1025
        %v1027 = vpop.f32.mrb[0].mxu0
        %1028 = vmatprep.mubr.f32.mxu0 0.0
        %v1029 = vand.u32 %v280, 4294901760
        %v1030 = vsub.f32 %v280, %v1029
        %v1031 = vand.u32 %v1030, 4294901760
        %1032 = vmatmul.mubr.f32.gmra.mrb[0].mxu0 %v1031
        %v1033 = vpop.f32.mrb[0].mxu0
        %v1034 = vadd.f32 %v842, %v1033
        %v1035 = vpop.f32.mrb[0].mxu0
        %1036 = vmatprep.mubr.f32.mxu0 0.0
        %v1037 = vand.u32 %v283, 4294901760
        %v1038 = vsub.f32 %v283, %v1037
        %v1039 = vand.u32 %v1038, 4294901760
        %1040 = vmatmul.mubr.f32.gmra.mrb[0].mxu0 %v1039
        %v1041 = vpop.f32.mrb[0].mxu0
        %v1042 = vadd.f32 %v849, %v1041
        %v1043 = vpop.f32.mrb[0].mxu0
        %1044 = vmatprep.mubr.f32.mxu0 0.0
        %v1045 = vand.u32 %v286, 4294901760
        %v1046 = vsub.f32 %v286, %v1045
        %v1047 = vand.u32 %v1046, 4294901760
        %1048 = vmatmul.mubr.f32.gmra.mrb[0].mxu0 %v1047
        %v1049 = vpop.f32.mrb[0].mxu0
        %v1050 = vadd.f32 %v856, %v1049
        %v1051 = vpop.f32.mrb[0].mxu0
        %1052 = vdwg.mxu0
        %1053 = vmatprep.subr.mxu0 0.0
        %v1054 = vand.u32 %v220, 4294901760
        %v1055 = vsub.f32 %v220, %v1054
        %v1056 = vand.u32 %v1055, 4294901760
        %1057 = vmatpush1.msra.mxu0 %v1056
        %1058 = vmatprep.subr.mxu0 0.0
        %1059 = vmatpush1.msra.mxu0 0.0
        %1060 = vmatprep.subr.mxu0 0.0
        %1061 = vmatpush1.msra.mxu0 0.0
        %1062 = vmatprep.subr.mxu0 0.0
        %1063 = vmatpush1.msra.mxu0 0.0
        %1064 = vmatprep.subr.mxu0 0.0
        %1065 = vmatpush1.msra.mxu0 0.0
        %1066 = vmatprep.subr.mxu0 0.0
        %1067 = vmatpush1.msra.mxu0 0.0
        %1068 = vmatprep.subr.mxu0 0.0
        %1069 = vmatpush1.msra.mxu0 0.0
        %1070 = vmatprep.subr.mxu0 0.0
        %1071 = vmatpush1.msra.mxu0 0.0
        %1072 = vmatprep.subr.mxu0 0.0
        %1073 = vmatpush1.msra.mxu0 0.0
        %1074 = vmatprep.subr.mxu0 0.0
        %1075 = vmatpush1.msra.mxu0 0.0
        %1076 = vmatprep.subr.mxu0 0.0
        %1077 = vmatpush1.msra.mxu0 0.0
        %1078 = vmatprep.subr.mxu0 0.0
        %1079 = vmatpush1.msra.mxu0 0.0
        %1080 = vmatprep.subr.mxu0 0.0
        %1081 = vmatpush1.msra.mxu0 0.0
        %1082 = vmatprep.subr.mxu0 0.0
        %1083 = vmatpush1.msra.mxu0 0.0
        %1084 = vmatprep.subr.mxu0 0.0
        %1085 = vmatpush1.msra.mxu0 0.0
        %1086 = vmatprep.subr.mxu0 0.0
        %1087 = vmatpush1.msra.mxu0 0.0
        %1088 = vmatprep.subr.mxu0 0.0
        %1089 = vmatpush1.msra.mxu0 0.0
        %1090 = vmatprep.subr.mxu0 0.0
        %1091 = vmatpush1.msra.mxu0 0.0
        %1092 = vmatprep.subr.mxu0 0.0
        %1093 = vmatpush1.msra.mxu0 0.0
        %1094 = vmatprep.subr.mxu0 0.0
        %1095 = vmatpush1.msra.mxu0 0.0
        %1096 = vmatprep.subr.mxu0 0.0
        %1097 = vmatpush1.msra.mxu0 0.0
        %1098 = vmatprep.subr.mxu0 0.0
        %1099 = vmatpush1.msra.mxu0 0.0
        %1100 = vmatprep.subr.mxu0 0.0
        %1101 = vmatpush1.msra.mxu0 0.0
        %1102 = vmatprep.subr.mxu0 0.0
        %1103 = vmatpush1.msra.mxu0 0.0
        %1104 = vmatprep.subr.mxu0 0.0
        %1105 = vmatpush1.msra.mxu0 0.0
        %1106 = vmatprep.subr.mxu0 0.0
        %1107 = vmatpush1.msra.mxu0 0.0
        %1108 = vmatprep.subr.mxu0 0.0
        %1109 = vmatpush1.msra.mxu0 0.0
        %1110 = vmatprep.subr.mxu0 0.0
        %1111 = vmatpush1.msra.mxu0 0.0
        %1112 = vmatprep.subr.mxu0 0.0
        %1113 = vmatpush1.msra.mxu0 0.0
        %1114 = vmatprep.subr.mxu0 0.0
        %1115 = vmatpush1.msra.mxu0 0.0
        %1116 = vmatprep.subr.mxu0 0.0
        %1117 = vmatpush1.msra.mxu0 0.0
        %1118 = vmatprep.subr.mxu0 0.0
        %1119 = vmatpush1.msra.mxu0 0.0
        %1120 = vmatprep.mubr.f32.mxu0 0.0
        %v1121 = vand.u32 %v241, 4294901760
        %1122 = vmatmul.mubr.f32.gmra.mrb[0].mxu0 %v1121
        %v1123 = vpop.f32.mrb[0].mxu0
        %v1124 = vadd.f32 %v930, %v1123
        %v1125 = vpop.f32.mrb[0].mxu0
        %1126 = vmatprep.mubr.f32.mxu0 0.0
        %v1127 = vand.u32 %v244, 4294901760
        %1128 = vmatmul.mubr.f32.gmra.mrb[0].mxu0 %v1127
        %v1129 = vpop.f32.mrb[0].mxu0
        %v1130 = vadd.f32 %v938, %v1129
        %v1131 = vpop.f32.mrb[0].mxu0
        %1132 = vmatprep.mubr.f32.mxu0 0.0
        %v1133 = vand.u32 %v247, 4294901760
        %1134 = vmatmul.mubr.f32.gmra.mrb[0].mxu0 %v1133
        %v1135 = vpop.f32.mrb[0].mxu0
        %v1136 = vadd.f32 %v946, %v1135
        %v1137 = vpop.f32.mrb[0].mxu0
        %1138 = vmatprep.mubr.f32.mxu0 0.0
        %v1139 = vand.u32 %v250, 4294901760
        %1140 = vmatmul.mubr.f32.gmra.mrb[0].mxu0 %v1139
        %v1141 = vpop.f32.mrb[0].mxu0
        %v1142 = vadd.f32 %v954, %v1141
        %v1143 = vpop.f32.mrb[0].mxu0
        %1144 = vmatprep.mubr.f32.mxu0 0.0
        %v1145 = vand.u32 %v253, 4294901760
        %1146 = vmatmul.mubr.f32.gmra.mrb[0].mxu0 %v1145
        %v1147 = vpop.f32.mrb[0].mxu0
        %v1148 = vadd.f32 %v962, %v1147
        %v1149 = vpop.f32.mrb[0].mxu0
        %1150 = vmatprep.mubr.f32.mxu0 0.0
        %v1151 = vand.u32 %v256, 4294901760
        %1152 = vmatmul.mubr.f32.gmra.mrb[0].mxu0 %v1151
        %v1153 = vpop.f32.mrb[0].mxu0
        %v1154 = vadd.f32 %v970, %v1153
        %v1155 = vpop.f32.mrb[0].mxu0
        %1156 = vmatprep.mubr.f32.mxu0 0.0
        %v1157 = vand.u32 %v259, 4294901760
        %1158 = vmatmul.mubr.f32.gmra.mrb[0].mxu0 %v1157
        %v1159 = vpop.f32.mrb[0].mxu0
        %v1160 = vadd.f32 %v978, %v1159
        %v1161 = vpop.f32.mrb[0].mxu0
        %1162 = vmatprep.mubr.f32.mxu0 0.0
        %v1163 = vand.u32 %v262, 4294901760
        %1164 = vmatmul.mubr.f32.gmra.mrb[0].mxu0 %v1163
        %v1165 = vpop.f32.mrb[0].mxu0
        %v1166 = vadd.f32 %v986, %v1165
        %v1167 = vpop.f32.mrb[0].mxu0
        %1168 = vmatprep.mubr.f32.mxu0 0.0
        %v1169 = vand.u32 %v265, 4294901760
        %1170 = vmatmul.mubr.f32.gmra.mrb[0].mxu0 %v1169
        %v1171 = vpop.f32.mrb[0].mxu0
        %v1172 = vadd.f32 %v994, %v1171
        %v1173 = vpop.f32.mrb[0].mxu0
        %1174 = vmatprep.mubr.f32.mxu0 0.0
        %v1175 = vand.u32 %v268, 4294901760
        %1176 = vmatmul.mubr.f32.gmra.mrb[0].mxu0 %v1175
        %v1177 = vpop.f32.mrb[0].mxu0
        %v1178 = vadd.f32 %v1002, %v1177
        %v1179 = vpop.f32.mrb[0].mxu0
        %1180 = vmatprep.mubr.f32.mxu0 0.0
        %v1181 = vand.u32 %v271, 4294901760
        %1182 = vmatmul.mubr.f32.gmra.mrb[0].mxu0 %v1181
        %v1183 = vpop.f32.mrb[0].mxu0
        %v1184 = vadd.f32 %v1010, %v1183
        %v1185 = vpop.f32.mrb[0].mxu0
        %1186 = vmatprep.mubr.f32.mxu0 0.0
        %v1187 = vand.u32 %v274, 4294901760
        %1188 = vmatmul.mubr.f32.gmra.mrb[0].mxu0 %v1187
        %v1189 = vpop.f32.mrb[0].mxu0
        %v1190 = vadd.f32 %v1018, %v1189
        %v1191 = vpop.f32.mrb[0].mxu0
        %1192 = vmatprep.mubr.f32.mxu0 0.0
        %v1193 = vand.u32 %v277, 4294901760
        %1194 = vmatmul.mubr.f32.gmra.mrb[0].mxu0 %v1193
        %v1195 = vpop.f32.mrb[0].mxu0
        %v1196 = vadd.f32 %v1026, %v1195
        %v1197 = vpop.f32.mrb[0].mxu0
        %1198 = vmatprep.mubr.f32.mxu0 0.0
        %v1199 = vand.u32 %v280, 4294901760
        %1200 = vmatmul.mubr.f32.gmra.mrb[0].mxu0 %v1199
        %v1201 = vpop.f32.mrb[0].mxu0
        %v1202 = vadd.f32 %v1034, %v1201
        %v1203 = vpop.f32.mrb[0].mxu0
        %1204 = vmatprep.mubr.f32.mxu0 0.0
        %v1205 = vand.u32 %v283, 4294901760
        %1206 = vmatmul.mubr.f32.gmra.mrb[0].mxu0 %v1205
        %v1207 = vpop.f32.mrb[0].mxu0
        %v1208 = vadd.f32 %v1042, %v1207
        %v1209 = vpop.f32.mrb[0].mxu0
        %1210 = vmatprep.mubr.f32.mxu0 0.0
        %v1211 = vand.u32 %v286, 4294901760
        %1212 = vmatmul.mubr.f32.gmra.mrb[0].mxu0 %v1211
        %v1213 = vpop.f32.mrb[0].mxu0
        %v1214 = vadd.f32 %v1050, %v1213
        %v1215 = vpop.f32.mrb[0].mxu0
        %1216 = vdwg.mxu0
        %1217 = vmatprep.subr.mxu0 0.0
        %v1218 = vand.u32 %v220, 4294901760
        %1219 = vmatpush1.msra.mxu0 %v1218
        %1220 = vmatprep.subr.mxu0 0.0
        %1221 = vmatpush1.msra.mxu0 0.0
        %1222 = vmatprep.subr.mxu0 0.0
        %1223 = vmatpush1.msra.mxu0 0.0
        %1224 = vmatprep.subr.mxu0 0.0
        %1225 = vmatpush1.msra.mxu0 0.0
        %1226 = vmatprep.subr.mxu0 0.0
        %1227 = vmatpush1.msra.mxu0 0.0
        %1228 = vmatprep.subr.mxu0 0.0
        %1229 = vmatpush1.msra.mxu0 0.0
        %1230 = vmatprep.subr.mxu0 0.0
        %1231 = vmatpush1.msra.mxu0 0.0
        %1232 = vmatprep.subr.mxu0 0.0
        %1233 = vmatpush1.msra.mxu0 0.0
        %1234 = vmatprep.subr.mxu0 0.0
        %1235 = vmatpush1.msra.mxu0 0.0
        %1236 = vmatprep.subr.mxu0 0.0
        %1237 = vmatpush1.msra.mxu0 0.0
        %1238 = vmatprep.subr.mxu0 0.0
        %1239 = vmatpush1.msra.mxu0 0.0
        %1240 = vmatprep.subr.mxu0 0.0
        %1241 = vmatpush1.msra.mxu0 0.0
        %1242 = vmatprep.subr.mxu0 0.0
        %1243 = vmatpush1.msra.mxu0 0.0
        %1244 = vmatprep.subr.mxu0 0.0
        %1245 = vmatpush1.msra.mxu0 0.0
        %1246 = vmatprep.subr.mxu0 0.0
        %1247 = vmatpush1.msra.mxu0 0.0
        %1248 = vmatprep.subr.mxu0 0.0
        %1249 = vmatpush1.msra.mxu0 0.0
        %1250 = vmatprep.subr.mxu0 0.0
        %1251 = vmatpush1.msra.mxu0 0.0
        %1252 = vmatprep.subr.mxu0 0.0
        %1253 = vmatpush1.msra.mxu0 0.0
        %1254 = vmatprep.subr.mxu0 0.0
        %1255 = vmatpush1.msra.mxu0 0.0
        %1256 = vmatprep.subr.mxu0 0.0
        %1257 = vmatpush1.msra.mxu0 0.0
        %1258 = vmatprep.subr.mxu0 0.0
        %1259 = vmatpush1.msra.mxu0 0.0
        %1260 = vmatprep.subr.mxu0 0.0
        %1261 = vmatpush1.msra.mxu0 0.0
        %1262 = vmatprep.subr.mxu0 0.0
        %1263 = vmatpush1.msra.mxu0 0.0
        %1264 = vmatprep.subr.mxu0 0.0
        %1265 = vmatpush1.msra.mxu0 0.0
        %1266 = vmatprep.subr.mxu0 0.0
        %1267 = vmatpush1.msra.mxu0 0.0
        %1268 = vmatprep.subr.mxu0 0.0
        %1269 = vmatpush1.msra.mxu0 0.0
        %1270 = vmatprep.subr.mxu0 0.0
        %1271 = vmatpush1.msra.mxu0 0.0
        %1272 = vmatprep.subr.mxu0 0.0
        %1273 = vmatpush1.msra.mxu0 0.0
        %1274 = vmatprep.subr.mxu0 0.0
        %1275 = vmatpush1.msra.mxu0 0.0
        %1276 = vmatprep.subr.mxu0 0.0
        %1277 = vmatpush1.msra.mxu0 0.0
        %1278 = vmatprep.subr.mxu0 0.0
        %1279 = vmatpush1.msra.mxu0 0.0
        %1280 = vmatprep.subr.mxu0 0.0
        %1281 = vmatpush1.msra.mxu0 0.0
        %1282 = vmatprep.mubr.f32.mxu0 0.0
        %v1283 = vand.u32 %v241, 4294901760
        %1284 = vmatmul.mubr.f32.gmra.mrb[0].mxu0 %v1283
        %v1285 = vpop.f32.mrb[0].mxu0
        %v1286 = vadd.f32 %v1124, %v1285
        %v1287 = vpop.f32.mrb[0].mxu0
        %1288 = vmatprep.mubr.f32.mxu0 0.0
        %v1289 = vand.u32 %v244, 4294901760
        %1290 = vmatmul.mubr.f32.gmra.mrb[0].mxu0 %v1289
        %v1291 = vpop.f32.mrb[0].mxu0
        %v1292 = vadd.f32 %v1130, %v1291
        %v1293 = vpop.f32.mrb[0].mxu0
        %1294 = vmatprep.mubr.f32.mxu0 0.0
        %v1295 = vand.u32 %v247, 4294901760
        %1296 = vmatmul.mubr.f32.gmra.mrb[0].mxu0 %v1295
        %v1297 = vpop.f32.mrb[0].mxu0
        %v1298 = vadd.f32 %v1136, %v1297
        %v1299 = vpop.f32.mrb[0].mxu0
        %1300 = vmatprep.mubr.f32.mxu0 0.0
        %v1301 = vand.u32 %v250, 4294901760
        %1302 = vmatmul.mubr.f32.gmra.mrb[0].mxu0 %v1301
        %v1303 = vpop.f32.mrb[0].mxu0
        %v1304 = vadd.f32 %v1142, %v1303
        %v1305 = vpop.f32.mrb[0].mxu0
        %1306 = vmatprep.mubr.f32.mxu0 0.0
        %v1307 = vand.u32 %v253, 4294901760
        %1308 = vmatmul.mubr.f32.gmra.mrb[0].mxu0 %v1307
        %v1309 = vpop.f32.mrb[0].mxu0
        %v1310 = vadd.f32 %v1148, %v1309
        %v1311 = vpop.f32.mrb[0].mxu0
        %1312 = vmatprep.mubr.f32.mxu0 0.0
        %v1313 = vand.u32 %v256, 4294901760
        %1314 = vmatmul.mubr.f32.gmra.mrb[0].mxu0 %v1313
        %v1315 = vpop.f32.mrb[0].mxu0
        %v1316 = vadd.f32 %v1154, %v1315
        %v1317 = vpop.f32.mrb[0].mxu0
        %1318 = vmatprep.mubr.f32.mxu0 0.0
        %v1319 = vand.u32 %v259, 4294901760
        %1320 = vmatmul.mubr.f32.gmra.mrb[0].mxu0 %v1319
        %v1321 = vpop.f32.mrb[0].mxu0
        %v1322 = vadd.f32 %v1160, %v1321
        %v1323 = vpop.f32.mrb[0].mxu0
        %1324 = vmatprep.mubr.f32.mxu0 0.0
        %v1325 = vand.u32 %v262, 4294901760
        %1326 = vmatmul.mubr.f32.gmra.mrb[0].mxu0 %v1325
        %v1327 = vpop.f32.mrb[0].mxu0
        %v1328 = vadd.f32 %v1166, %v1327
        %v1329 = vpop.f32.mrb[0].mxu0
        %1330 = vmatprep.mubr.f32.mxu0 0.0
        %v1331 = vand.u32 %v265, 4294901760
        %1332 = vmatmul.mubr.f32.gmra.mrb[0].mxu0 %v1331
        %v1333 = vpop.f32.mrb[0].mxu0
        %v1334 = vadd.f32 %v1172, %v1333
        %v1335 = vpop.f32.mrb[0].mxu0
        %1336 = vmatprep.mubr.f32.mxu0 0.0
        %v1337 = vand.u32 %v268, 4294901760
        %1338 = vmatmul.mubr.f32.gmra.mrb[0].mxu0 %v1337
        %v1339 = vpop.f32.mrb[0].mxu0
        %v1340 = vadd.f32 %v1178, %v1339
        %v1341 = vpop.f32.mrb[0].mxu0
        %1342 = vmatprep.mubr.f32.mxu0 0.0
        %v1343 = vand.u32 %v271, 4294901760
        %1344 = vmatmul.mubr.f32.gmra.mrb[0].mxu0 %v1343
        %v1345 = vpop.f32.mrb[0].mxu0
        %v1346 = vadd.f32 %v1184, %v1345
        %v1347 = vpop.f32.mrb[0].mxu0
        %1348 = vmatprep.mubr.f32.mxu0 0.0
        %v1349 = vand.u32 %v274, 4294901760
        %1350 = vmatmul.mubr.f32.gmra.mrb[0].mxu0 %v1349
        %v1351 = vpop.f32.mrb[0].mxu0
        %v1352 = vadd.f32 %v1190, %v1351
        %v1353 = vpop.f32.mrb[0].mxu0
        %1354 = vmatprep.mubr.f32.mxu0 0.0
        %v1355 = vand.u32 %v277, 4294901760
        %1356 = vmatmul.mubr.f32.gmra.mrb[0].mxu0 %v1355
        %v1357 = vpop.f32.mrb[0].mxu0
        %v1358 = vadd.f32 %v1196, %v1357
        %v1359 = vpop.f32.mrb[0].mxu0
        %1360 = vmatprep.mubr.f32.mxu0 0.0
        %v1361 = vand.u32 %v280, 4294901760
        %1362 = vmatmul.mubr.f32.gmra.mrb[0].mxu0 %v1361
        %v1363 = vpop.f32.mrb[0].mxu0
        %v1364 = vadd.f32 %v1202, %v1363
        %v1365 = vpop.f32.mrb[0].mxu0
        %1366 = vmatprep.mubr.f32.mxu0 0.0
        %v1367 = vand.u32 %v283, 4294901760
        %1368 = vmatmul.mubr.f32.gmra.mrb[0].mxu0 %v1367
        %v1369 = vpop.f32.mrb[0].mxu0
        %v1370 = vadd.f32 %v1208, %v1369
        %v1371 = vpop.f32.mrb[0].mxu0
        %1372 = vmatprep.mubr.f32.mxu0 0.0
        %v1373 = vand.u32 %v286, 4294901760
        %1374 = vmatmul.mubr.f32.gmra.mrb[0].mxu0 %v1373
        %v1375 = vpop.f32.mrb[0].mxu0
        %v1376 = vadd.f32 %v1214, %v1375
        %v1377 = vpop.f32.mrb[0].mxu0
        %1378 = vdwg.mxu0
        %v1379 = vmin.f32 %v221, %v1286
        %v1380 = vmin.f32 %v222, %v1292
        %v1381 = vmin.f32 %v223, %v1298
        %v1382 = vmin.f32 %v224, %v1304
        %v1383 = vmin.f32 %v225, %v1310
        %v1384 = vmin.f32 %v226, %v1316
        %v1385 = vmin.f32 %v227, %v1322
        %v1386 = vmin.f32 %v228, %v1328
        %v1387 = vmin.f32 %v229, %v1334
        %v1388 = vmin.f32 %v230, %v1340
        %v1389 = vmin.f32 %v231, %v1346
        %v1390 = vmin.f32 %v232, %v1352
        %v1391 = vmin.f32 %v233, %v1358
        %v1392 = vmin.f32 %v234, %v1364
        %v1393 = vmin.f32 %v235, %v1370
        %v1394 = vmin.f32 %v236, %v1376
        %v1395 = vmin.f32 %v1286, %v1310
        %v1396 = vmin.f32 %v1292, %v1316
        %v1397 = vmin.f32 %v1298, %v1322
        %v1398 = vmin.f32 %v1304, %v1328
        %v1399 = vmin.f32 %v1395, %v1334
        %v1400 = vmin.f32 %v1396, %v1340
        %v1401 = vmin.f32 %v1397, %v1346
        %v1402 = vmin.f32 %v1398, %v1352
        %v1403 = vmin.f32 %v1399, %v1358
        %v1404 = vmin.f32 %v1400, %v1364
        %v1405 = vmin.f32 %v1401, %v1370
        %v1406 = vmin.f32 %v1402, %v1376
        %v1407 = vmin.f32 %v1403, %v1404
        %v1408 = vmin.f32 %v1405, %v1406
        %v1409 = vmin.f32 %v1407, %v1408
        %v1410 = vrot.slane %v1409, 4
        %v1411 = vmin.f32 %v1409, %v1410
        %v1412 = vrot.slane %v1411, 2
        %v1413 = vmin.f32 %v1411, %v1412
        %v1414 = vrot.slane %v1413, 1
        %v1415 = vmin.f32 %v1413, %v1414
        %vm1416 = vcmp.lt.f32.partialorder %v1415, 5e+29
        %v1417 = vmax.f32 %v1415, 0.0
        %v1418 = vsel %vm1416, %v1417, 0.0
        %v1419 = vadd.f32 %v237, %v1418
        %v1420 = vrsqrt.pop %v1417
        %v1421 = vmul.f32 %v1417, %v1420
        %vm1422 = vcmp.eq.f32.partialorder %v1417, inf
        %v1423 = vsel %vm1422, %v1417, %v1421
        %vm1424 = vcmp.eq.f32.partialorder %v1417, 0.0
        %v1425 = vand.u32 %v1417, 2147483648
        %v1426 = vsel %vm1424, %v1425, %v1423
        %v1427 = vsel %vm1416, %v1426, 0.0
        %v1428 = vadd.f32 %v238, %v1427
        %1429 = vst [vmem:[#allocation2] sm:$0xff] %v1379
        %1430 = vst [vmem:[#allocation2 + $0x8] sm:$0xff] %v1380
        %1431 = vst [vmem:[#allocation2 + $0x10] sm:$0xff] %v1381
        %1432 = vst [vmem:[#allocation2 + $0x18] sm:$0xff] %v1382
        %1433 = vst [vmem:[#allocation2 + $0x20] sm:$0xff] %v1383
        %1434 = vst [vmem:[#allocation2 + $0x28] sm:$0xff] %v1384
        %1435 = vst [vmem:[#allocation2 + $0x30] sm:$0xff] %v1385
        %1436 = vst [vmem:[#allocation2 + $0x38] sm:$0xff] %v1386
        %1437 = vst [vmem:[#allocation2 + $0x40] sm:$0xff] %v1387
        %1438 = vst [vmem:[#allocation2 + $0x48] sm:$0xff] %v1388
        %1439 = vst [vmem:[#allocation2 + $0x50] sm:$0xff] %v1389
        %1440 = vst [vmem:[#allocation2 + $0x58] sm:$0xff] %v1390
        %1441 = vst [vmem:[#allocation2 + $0x60] sm:$0xff] %v1391
        %1442 = vst [vmem:[#allocation2 + $0x68] sm:$0xff] %v1392
        %1443 = vst [vmem:[#allocation2 + $0x70] sm:$0xff] %v1393
        %1444 = vst [vmem:[#allocation2 + $0x78] sm:$0xff] %v1394
        %1445 = vst [vmem:[#allocation3] sm:$0x1] %v1419
        %1446 = vst [vmem:[#allocation4] sm:$0x1] %v1428
        // Predicated region
        $region33: #{tpu_custom_call.1} parent=27 // pred_check
          %p1447 = pneg %p182
        $region34: #{tpu_custom_call.1} parent=27 // pred_check_branch
          %1449 = sbr.rel (%p1447) target = $region36
        $region35: #{tpu_custom_call.1} parent=27 // pred_region
          %1450 = vmin.xlane.f32.xlu0 %v1379
          %v1451 = vpop.xlane.xlu0 %1450
          %1452 = vmin.xlane.f32.xlu0 %v1380
          %v1453 = vpop.xlane.xlu0 %1452
          %1454 = vmin.xlane.f32.xlu0 %v1381
          %v1455 = vpop.xlane.xlu0 %1454
          %1456 = vmin.xlane.f32.xlu0 %v1382
          %v1457 = vpop.xlane.xlu0 %1456
          %1458 = vmin.xlane.f32.xlu0 %v1383
          %v1459 = vpop.xlane.xlu0 %1458
          %1460 = vmin.xlane.f32.xlu0 %v1384
          %v1461 = vpop.xlane.xlu0 %1460
          %1462 = vmin.xlane.f32.xlu0 %v1385
          %v1463 = vpop.xlane.xlu0 %1462
          %1464 = vmin.xlane.f32.xlu0 %v1386
          %v1465 = vpop.xlane.xlu0 %1464
          %1466 = vmin.xlane.f32.xlu0 %v1387
          %v1467 = vpop.xlane.xlu0 %1466
          %1468 = vmin.xlane.f32.xlu0 %v1388
          %v1469 = vpop.xlane.xlu0 %1468
          %1470 = vmin.xlane.f32.xlu0 %v1389
          %v1471 = vpop.xlane.xlu0 %1470
          %1472 = vmin.xlane.f32.xlu0 %v1390
          %v1473 = vpop.xlane.xlu0 %1472
          %1474 = vmin.xlane.f32.xlu0 %v1391
          %v1475 = vpop.xlane.xlu0 %1474
          %1476 = vmin.xlane.f32.xlu0 %v1392
          %v1477 = vpop.xlane.xlu0 %1476
          %1478 = vmin.xlane.f32.xlu0 %v1393
          %v1479 = vpop.xlane.xlu0 %1478
          %1480 = vmin.xlane.f32.xlu0 %v1394
          %v1481 = vpop.xlane.xlu0 %1480
          %v1482 = vmax.f32 %v1451, 0.0
          %v1483 = vmax.f32 %v1453, 0.0
          %v1484 = vmax.f32 %v1455, 0.0
          %v1485 = vmax.f32 %v1457, 0.0
          %v1486 = vmax.f32 %v1459, 0.0
          %v1487 = vmax.f32 %v1461, 0.0
          %v1488 = vmax.f32 %v1463, 0.0
          %v1489 = vmax.f32 %v1465, 0.0
          %v1490 = vmax.f32 %v1467, 0.0
          %v1491 = vmax.f32 %v1469, 0.0
          %v1492 = vmax.f32 %v1471, 0.0
          %v1493 = vmax.f32 %v1473, 0.0
          %v1494 = vmax.f32 %v1475, 0.0
          %v1495 = vmax.f32 %v1477, 0.0
          %v1496 = vmax.f32 %v1479, 0.0
          %v1497 = vmax.f32 %v1481, 0.0
          %v1498 = vlaneseq
          %v1499 = vshrl.u32 %v1498, 7
          %v1500 = vadd.s32 %v1499, 8
          %v1501 = vadd.s32 %v1499, 16
          %v1502 = vadd.s32 %v1499, 24
          %v1503 = vadd.s32 %v1499, 32
          %v1504 = vadd.s32 %v1499, 40
          %v1505 = vadd.s32 %v1499, 48
          %v1506 = vadd.s32 %v1499, 56
          %v1507 = vadd.s32 %v1499, 64
          %v1508 = vadd.s32 %v1499, 72
          %v1509 = vadd.s32 %v1499, 80
          %v1510 = vadd.s32 %v1499, 88
          %v1511 = vadd.s32 %v1499, 96
          %v1512 = vadd.s32 %v1499, 104
          %v1513 = vadd.s32 %v1499, 112
          %v1514 = vadd.s32 %v1499, 120
          %vm1515 = vcmp.lt.s32.totalorder %v1499, 96
          %vm1516 = vcmp.lt.s32.totalorder %v1500, 96
          %vm1517 = vcmp.lt.s32.totalorder %v1501, 96
          %vm1518 = vcmp.lt.s32.totalorder %v1502, 96
          %vm1519 = vcmp.lt.s32.totalorder %v1503, 96
          %vm1520 = vcmp.lt.s32.totalorder %v1504, 96
          %vm1521 = vcmp.lt.s32.totalorder %v1505, 96
          %vm1522 = vcmp.lt.s32.totalorder %v1506, 96
          %vm1523 = vcmp.lt.s32.totalorder %v1507, 96
          %vm1524 = vcmp.lt.s32.totalorder %v1508, 96
          %vm1525 = vcmp.lt.s32.totalorder %v1509, 96
          %vm1526 = vcmp.lt.s32.totalorder %v1510, 96
          %vm1527 = vcmp.lt.s32.totalorder %v1511, 96
          %vm1528 = vcmp.lt.s32.totalorder %v1512, 96
          %vm1529 = vcmp.lt.s32.totalorder %v1513, 96
          %vm1530 = vcmp.lt.s32.totalorder %v1514, 96
          %v1531 = vsel %vm1515, %v1482, 0.0
          %v1532 = vsel %vm1516, %v1483, 0.0
          %v1533 = vsel %vm1517, %v1484, 0.0
          %v1534 = vsel %vm1518, %v1485, 0.0
          %v1535 = vsel %vm1519, %v1486, 0.0
          %v1536 = vsel %vm1520, %v1487, 0.0
          %v1537 = vsel %vm1521, %v1488, 0.0
          %v1538 = vsel %vm1522, %v1489, 0.0
          %v1539 = vsel %vm1523, %v1490, 0.0
          %v1540 = vsel %vm1524, %v1491, 0.0
          %v1541 = vsel %vm1525, %v1492, 0.0
          %v1542 = vsel %vm1526, %v1493, 0.0
          %v1543 = vsel %vm1527, %v1494, 0.0
          %v1544 = vsel %vm1528, %v1495, 0.0
          %v1545 = vsel %vm1529, %v1496, 0.0
          %v1546 = vsel %vm1530, %v1497, 0.0
          %vm1547 = vcmask 7168
          %v1548 = vsel %vm1547, %v1531, 0.0
          %v1549 = vsel %vm1547, %v1532, 0.0
          %v1550 = vadd.f32 %v1548, %v1549
          %v1551 = vsel %vm1547, %v1533, 0.0
          %v1552 = vadd.f32 %v1550, %v1551
          %v1553 = vsel %vm1547, %v1534, 0.0
          %v1554 = vadd.f32 %v1552, %v1553
          %v1555 = vsel %vm1547, %v1535, 0.0
          %v1556 = vadd.f32 %v1554, %v1555
          %v1557 = vsel %vm1547, %v1536, 0.0
          %v1558 = vadd.f32 %v1556, %v1557
          %v1559 = vsel %vm1547, %v1537, 0.0
          %v1560 = vadd.f32 %v1558, %v1559
          %v1561 = vsel %vm1547, %v1538, 0.0
          %v1562 = vadd.f32 %v1560, %v1561
          %v1563 = vsel %vm1547, %v1539, 0.0
          %v1564 = vadd.f32 %v1562, %v1563
          %v1565 = vsel %vm1547, %v1540, 0.0
          %v1566 = vadd.f32 %v1564, %v1565
          %v1567 = vsel %vm1547, %v1541, 0.0
          %v1568 = vadd.f32 %v1566, %v1567
          %v1569 = vsel %vm1547, %v1542, 0.0
          %v1570 = vadd.f32 %v1568, %v1569
          %v1571 = vsel %vm1547, %v1543, 0.0
          %v1572 = vadd.f32 %v1570, %v1571
          %v1573 = vsel %vm1547, %v1544, 0.0
          %v1574 = vadd.f32 %v1572, %v1573
          %v1575 = vsel %vm1547, %v1545, 0.0
          %v1576 = vadd.f32 %v1574, %v1575
          %v1577 = vsel %vm1547, %v1546, 0.0
          %v1578 = vadd.f32 %v1576, %v1577
          %1579 = vadd.xlane.f32.xlu0 %v1578
          %v1580 = vpop.xlane.xlu0 %1579
          %v1581 = vrot.slane %v1580, 4
          %v1582 = vadd.f32 %v1580, %v1581
          %v1583 = vrot.slane %v1582, 2
          %v1584 = vadd.f32 %v1582, %v1583
          %v1585 = vrot.slane %v1584, 1
          %v1586 = vadd.f32 %v1584, %v1585
          %s1587 = vtos %v1586
          %s1588 = smul.f32 %s1587, 0.010416667
          %v1589 = vrsqrt.pop %v1482
          %v1590 = vmul.f32 %v1482, %v1589
          %vm1591 = vcmp.eq.f32.partialorder %v1482, inf
          %v1592 = vsel %vm1591, %v1482, %v1590
          %vm1593 = vcmp.eq.f32.partialorder %v1482, 0.0
          %v1594 = vand.u32 %v1482, 2147483648
          %v1595 = vsel %vm1593, %v1594, %v1592
          %v1596 = vrsqrt.pop %v1483
          %v1597 = vmul.f32 %v1483, %v1596
          %vm1598 = vcmp.eq.f32.partialorder %v1483, inf
          %v1599 = vsel %vm1598, %v1483, %v1597
          %vm1600 = vcmp.eq.f32.partialorder %v1483, 0.0
          %v1601 = vand.u32 %v1483, 2147483648
          %v1602 = vsel %vm1600, %v1601, %v1599
          %v1603 = vrsqrt.pop %v1484
          %v1604 = vmul.f32 %v1484, %v1603
          %vm1605 = vcmp.eq.f32.partialorder %v1484, inf
          %v1606 = vsel %vm1605, %v1484, %v1604
          %vm1607 = vcmp.eq.f32.partialorder %v1484, 0.0
          %v1608 = vand.u32 %v1484, 2147483648
          %v1609 = vsel %vm1607, %v1608, %v1606
          %v1610 = vrsqrt.pop %v1485
          %v1611 = vmul.f32 %v1485, %v1610
          %vm1612 = vcmp.eq.f32.partialorder %v1485, inf
          %v1613 = vsel %vm1612, %v1485, %v1611
          %vm1614 = vcmp.eq.f32.partialorder %v1485, 0.0
          %v1615 = vand.u32 %v1485, 2147483648
          %v1616 = vsel %vm1614, %v1615, %v1613
          %v1617 = vrsqrt.pop %v1486
          %v1618 = vmul.f32 %v1486, %v1617
          %vm1619 = vcmp.eq.f32.partialorder %v1486, inf
          %v1620 = vsel %vm1619, %v1486, %v1618
          %vm1621 = vcmp.eq.f32.partialorder %v1486, 0.0
          %v1622 = vand.u32 %v1486, 2147483648
          %v1623 = vsel %vm1621, %v1622, %v1620
          %v1624 = vrsqrt.pop %v1487
          %v1625 = vmul.f32 %v1487, %v1624
          %vm1626 = vcmp.eq.f32.partialorder %v1487, inf
          %v1627 = vsel %vm1626, %v1487, %v1625
          %vm1628 = vcmp.eq.f32.partialorder %v1487, 0.0
          %v1629 = vand.u32 %v1487, 2147483648
          %v1630 = vsel %vm1628, %v1629, %v1627
          %v1631 = vrsqrt.pop %v1488
          %v1632 = vmul.f32 %v1488, %v1631
          %vm1633 = vcmp.eq.f32.partialorder %v1488, inf
          %v1634 = vsel %vm1633, %v1488, %v1632
          %vm1635 = vcmp.eq.f32.partialorder %v1488, 0.0
          %v1636 = vand.u32 %v1488, 2147483648
          %v1637 = vsel %vm1635, %v1636, %v1634
          %v1638 = vrsqrt.pop %v1489
          %v1639 = vmul.f32 %v1489, %v1638
          %vm1640 = vcmp.eq.f32.partialorder %v1489, inf
          %v1641 = vsel %vm1640, %v1489, %v1639
          %vm1642 = vcmp.eq.f32.partialorder %v1489, 0.0
          %v1643 = vand.u32 %v1489, 2147483648
          %v1644 = vsel %vm1642, %v1643, %v1641
          %v1645 = vrsqrt.pop %v1490
          %v1646 = vmul.f32 %v1490, %v1645
          %vm1647 = vcmp.eq.f32.partialorder %v1490, inf
          %v1648 = vsel %vm1647, %v1490, %v1646
          %vm1649 = vcmp.eq.f32.partialorder %v1490, 0.0
          %v1650 = vand.u32 %v1490, 2147483648
          %v1651 = vsel %vm1649, %v1650, %v1648
          %v1652 = vrsqrt.pop %v1491
          %v1653 = vmul.f32 %v1491, %v1652
          %vm1654 = vcmp.eq.f32.partialorder %v1491, inf
          %v1655 = vsel %vm1654, %v1491, %v1653
          %vm1656 = vcmp.eq.f32.partialorder %v1491, 0.0
          %v1657 = vand.u32 %v1491, 2147483648
          %v1658 = vsel %vm1656, %v1657, %v1655
          %v1659 = vrsqrt.pop %v1492
          %v1660 = vmul.f32 %v1492, %v1659
          %vm1661 = vcmp.eq.f32.partialorder %v1492, inf
          %v1662 = vsel %vm1661, %v1492, %v1660
          %vm1663 = vcmp.eq.f32.partialorder %v1492, 0.0
          %v1664 = vand.u32 %v1492, 2147483648
          %v1665 = vsel %vm1663, %v1664, %v1662
          %v1666 = vrsqrt.pop %v1493
          %v1667 = vmul.f32 %v1493, %v1666
          %vm1668 = vcmp.eq.f32.partialorder %v1493, inf
          %v1669 = vsel %vm1668, %v1493, %v1667
          %vm1670 = vcmp.eq.f32.partialorder %v1493, 0.0
          %v1671 = vand.u32 %v1493, 2147483648
          %v1672 = vsel %vm1670, %v1671, %v1669
          %v1673 = vrsqrt.pop %v1494
          %v1674 = vmul.f32 %v1494, %v1673
          %vm1675 = vcmp.eq.f32.partialorder %v1494, inf
          %v1676 = vsel %vm1675, %v1494, %v1674
          %vm1677 = vcmp.eq.f32.partialorder %v1494, 0.0
          %v1678 = vand.u32 %v1494, 2147483648
          %v1679 = vsel %vm1677, %v1678, %v1676
          %v1680 = vrsqrt.pop %v1495
          %v1681 = vmul.f32 %v1495, %v1680
          %vm1682 = vcmp.eq.f32.partialorder %v1495, inf
          %v1683 = vsel %vm1682, %v1495, %v1681
          %vm1684 = vcmp.eq.f32.partialorder %v1495, 0.0
          %v1685 = vand.u32 %v1495, 2147483648
          %v1686 = vsel %vm1684, %v1685, %v1683
          %v1687 = vrsqrt.pop %v1496
          %v1688 = vmul.f32 %v1496, %v1687
          %vm1689 = vcmp.eq.f32.partialorder %v1496, inf
          %v1690 = vsel %vm1689, %v1496, %v1688
          %vm1691 = vcmp.eq.f32.partialorder %v1496, 0.0
          %v1692 = vand.u32 %v1496, 2147483648
          %v1693 = vsel %vm1691, %v1692, %v1690
          %v1694 = vrsqrt.pop %v1497
          %v1695 = vmul.f32 %v1497, %v1694
          %vm1696 = vcmp.eq.f32.partialorder %v1497, inf
          %v1697 = vsel %vm1696, %v1497, %v1695
          %vm1698 = vcmp.eq.f32.partialorder %v1497, 0.0
          %v1699 = vand.u32 %v1497, 2147483648
          %v1700 = vsel %vm1698, %v1699, %v1697
          %v1701 = vsel %vm1515, %v1595, 0.0
          %v1702 = vsel %vm1516, %v1602, 0.0
          %v1703 = vsel %vm1517, %v1609, 0.0
          %v1704 = vsel %vm1518, %v1616, 0.0
          %v1705 = vsel %vm1519, %v1623, 0.0
          %v1706 = vsel %vm1520, %v1630, 0.0
          %v1707 = vsel %vm1521, %v1637, 0.0
          %v1708 = vsel %vm1522, %v1644, 0.0
          %v1709 = vsel %vm1523, %v1651, 0.0
          %v1710 = vsel %vm1524, %v1658, 0.0
          %v1711 = vsel %vm1525, %v1665, 0.0
          %v1712 = vsel %vm1526, %v1672, 0.0
          %v1713 = vsel %vm1527, %v1679, 0.0
          %v1714 = vsel %vm1528, %v1686, 0.0
          %v1715 = vsel %vm1529, %v1693, 0.0
          %v1716 = vsel %vm1530, %v1700, 0.0
          %v1717 = vsel %vm1547, %v1701, 0.0
          %v1718 = vsel %vm1547, %v1702, 0.0
          %v1719 = vadd.f32 %v1717, %v1718
          %v1720 = vsel %vm1547, %v1703, 0.0
          %v1721 = vadd.f32 %v1719, %v1720
          %v1722 = vsel %vm1547, %v1704, 0.0
          %v1723 = vadd.f32 %v1721, %v1722
          %v1724 = vsel %vm1547, %v1705, 0.0
          %v1725 = vadd.f32 %v1723, %v1724
          %v1726 = vsel %vm1547, %v1706, 0.0
          %v1727 = vadd.f32 %v1725, %v1726
          %v1728 = vsel %vm1547, %v1707, 0.0
          %v1729 = vadd.f32 %v1727, %v1728
          %v1730 = vsel %vm1547, %v1708, 0.0
          %v1731 = vadd.f32 %v1729, %v1730
          %v1732 = vsel %vm1547, %v1709, 0.0
          %v1733 = vadd.f32 %v1731, %v1732
          %v1734 = vsel %vm1547, %v1710, 0.0
          %v1735 = vadd.f32 %v1733, %v1734
          %v1736 = vsel %vm1547, %v1711, 0.0
          %v1737 = vadd.f32 %v1735, %v1736
          %v1738 = vsel %vm1547, %v1712, 0.0
          %v1739 = vadd.f32 %v1737, %v1738
          %v1740 = vsel %vm1547, %v1713, 0.0
          %v1741 = vadd.f32 %v1739, %v1740
          %v1742 = vsel %vm1547, %v1714, 0.0
          %v1743 = vadd.f32 %v1741, %v1742
          %v1744 = vsel %vm1547, %v1715, 0.0
          %v1745 = vadd.f32 %v1743, %v1744
          %v1746 = vsel %vm1547, %v1716, 0.0
          %v1747 = vadd.f32 %v1745, %v1746
          %1748 = vadd.xlane.f32.xlu0 %v1747
          %v1749 = vpop.xlane.xlu0 %1748
          %v1750 = vrot.slane %v1749, 4
          %v1751 = vadd.f32 %v1749, %v1750
          %v1752 = vrot.slane %v1751, 2
          %v1753 = vadd.f32 %v1751, %v1752
          %v1754 = vrot.slane %v1753, 1
          %v1755 = vadd.f32 %v1753, %v1754
          %s1756 = vtos %v1755
          %s1757 = smul.f32 %s1756, 0.010416667
          %vm1758 = vcmask 1040384
          %v1759 = vsel %vm1758, %v1419, 0.0
          %1760 = vadd.xlane.f32.xlu0 %v1759
          %v1761 = vpop.xlane.xlu0 %1760
          %v1762 = vrot.slane %v1761, 4
          %v1763 = vadd.f32 %v1761, %v1762
          %v1764 = vrot.slane %v1763, 2
          %v1765 = vadd.f32 %v1763, %v1764
          %v1766 = vrot.slane %v1765, 1
          %v1767 = vadd.f32 %v1765, %v1766
          %s1768 = vtos %v1767
          %s1769 = smul.f32 %s1768, 0.0078125
          %v1770 = vsel %vm1758, %v1428, 0.0
          %1771 = vadd.xlane.f32.xlu0 %v1770
          %v1772 = vpop.xlane.xlu0 %1771
          %v1773 = vrot.slane %v1772, 4
          %v1774 = vadd.f32 %v1772, %v1773
          %v1775 = vrot.slane %v1774, 2
          %v1776 = vadd.f32 %v1774, %v1775
          %v1777 = vrot.slane %v1776, 1
          %v1778 = vadd.f32 %v1776, %v1777
          %s1779 = vtos %v1778
          %s1780 = smul.f32 %s1779, 0.0078125
          %s1781 = sadd.f32 %s1757, %s1780
          %s1782 = smul.f32 %s1781, 0.5
          %s1783 = sadd.f32 %s1588, %s1769
          %vm1784 = vcmp.eq.s32.totalorder %v1499, 0
          %vm1785 = vcmp.eq.s32.totalorder %v1499, 1
          %v1786 = vstv %s1783
          %v1787 = vsel %vm1785, %v1786, 0.0
          %v1788 = vstv %s1782
          %v1789 = vsel %vm1784, %v1788, %v1787
          %1790 = vst [vmem:[%s169] sm:$0xff] %v1789
        $region36: #{tpu_custom_call.1} parent=27 // pred_fallthru
          _
        %s1791 = sand.u32 %s90, 1
        %s1792 = scalar_lea.sflag [#allocation7], %s1791
        %s1793 = sand.u32 %s90, 1
        %s1794 = smul.addr %s1793, 8
        %s1795 = scalar_lea.vmem [#allocation6], %s1794
        // Predicated region
        $region37: #{tpu_custom_call.1} parent=27 // pred_check
          %p1796 = pneg %p100
        $region38: #{tpu_custom_call.1} parent=27 // pred_check_branch
          %1798 = sbr.rel (%p1796) target = $region40
        $region39: #{tpu_custom_call.1} parent=27 // pred_region
          %s1800 = ssub.s32 128, 128
          %1801 = vsyncadd %s1792, %s1800
          %s1802 = smul.addr %s20, 128
          %s1803 = scalar_lea.hbm %s2, %s1802
          %s1805 = sshll.u32 %s1795, 4
          %s1806 = int_to_ptr.vmem [resolvable:$true] %s1805
          %1808 = dma.vmem_to_hbm [thread:$0]  %s1806, 128, %s1803, %s1792
        $region40: #{tpu_custom_call.1} parent=27 // pred_fallthru
          _
      $region28: #{tpu_custom_call.1} parent=5 // pred_fallthru
        _
      %p1809 = scmp.le.s32.totalorder 2, %s11
      // Predicated region
      $region41: #{tpu_custom_call.1} parent=5 // pred_check
        %p1810 = pneg %p1809
      $region42: #{tpu_custom_call.1} parent=5 // pred_check_branch
        %1812 = sbr.rel (%p1810) target = $region44
      $region43: #{tpu_custom_call.1} parent=5 // pred_region
        %s1813 = ssub.s32 %s11, 2
        // Predicated region
        $region45: #{tpu_custom_call.1} parent=43 // pred_check
          %p1814 = pneg %p106
        $region46: #{tpu_custom_call.1} parent=43 // pred_check_branch
          %1816 = sbr.rel (%p1814) target = $region48
        $region47: #{tpu_custom_call.1} parent=43 // pred_region
          %s1817 = sand.u32 %s91, 1
          %s1818 = scalar_lea.sflag [#allocation7], %s1817
          %s1819 = sand.u32 %s91, 1
          %s1820 = smul.addr %s1819, 8
          %s1821 = scalar_lea.vmem [#allocation6], %s1820
          %1822 = dma.done %s1818, 128
        $region48: #{tpu_custom_call.1} parent=43 // pred_fallthru
          _
      $region44: #{tpu_custom_call.1} parent=5 // pred_fallthru
        _
    $region6: #{tpu_custom_call.1} parent=1 // loop_footer
      %s15 = sadd.s32 1, %s11
    $region7: #{tpu_custom_call.1} parent=1 // loop_footer_branch
      %10 = sbr.rel target = $region3
    $region8: #{tpu_custom_call.1} parent=1 // loop_exit
      _
    %1823 = vsyncpa [#allocation7], 1
    %s1824 = scalar_lea.sflag [#allocation7], 1
    %1825 = vsyncpa %s1824, 1

</llo_original>
